<compile_context>
chip_gen: v7x
topology: tpu7x:2x2x1
jax: 0.10.0
libtpu: 0.0.40
codegen_flags: <defaults>
</compile_context>

<pallas_src>
import jax
import jax.numpy as jnp
from jax.experimental import pallas as pl
from jax.experimental.pallas import tpu as pltpu

INPUT_SIZE = 134 * 2      # 268
HIDDEN_SIZE = 1500
NUM_CLASSES = 2

# Hardware-padded shapes.
IN_PAD = 272              # 268 -> multiple of 16 (bf16 sublane packing); avoids inflating w1 DMA bytes
HID_PAD = 1536            # 1500 -> 12 * 128 lanes
OUT_PAD = 128             # 2 -> one full lane tile (lane-dense output store)


def _round_up(x, m):
    return ((x + m - 1) // m) * m


def _mlp_kernel(x_ref, w1_ref, b1_ref, w2_ref, b2_ref, o_ref):
    # fc1: bf16 operands into the MXU, f32 accumulation; bias/activation in f32.
    h = jnp.dot(x_ref[...], w1_ref[...], preferred_element_type=jnp.float32)
    h = h + b1_ref[...]
    # sigmoid: exp + approx reciprocal both land on the EUP slot (co-issues with VPU).
    h = pl.reciprocal(1.0 + jnp.exp(-h), approx=True)

    # fc2: cast activations to bf16 for the MXU, accumulate in f32.
    logits = jnp.dot(h.astype(jnp.bfloat16), w2_ref[...],
                     preferred_element_type=jnp.float32)
    logits = logits + b2_ref[...]

    # 2-class softmax == sigmoid(logit_0 - logit_1). This avoids XLU reductions over
    # a mostly-empty tile and keeps padded class lanes (2..127) out of the normalization.
    d = logits[:, 0:1] - logits[:, 1:2]
    p0 = pl.reciprocal(1.0 + jnp.exp(-d), approx=True)
    p1 = 1.0 - p0

    lane = jax.lax.broadcasted_iota(jnp.int32, o_ref.shape, 1)
    o_ref[...] = jnp.where(lane == 0, p0, jnp.where(lane == 1, p1, 0.0))


def prepare_params(w1, b1, w2, b2):
    """Pad f32 params (stored (in_features, out_features)) to hardware tiles; weights -> bf16.

    Padded hidden columns of w1 are zero (=> padded activations are sigmoid(0)=0.5) but the
    corresponding padded rows of w2 are zero, so they never contribute to the logits.
    """
    w1p = jnp.zeros((IN_PAD, HID_PAD), jnp.float32).at[:INPUT_SIZE, :HIDDEN_SIZE].set(w1)
    b1p = jnp.zeros((1, HID_PAD), jnp.float32).at[:, :HIDDEN_SIZE].set(b1)
    w2p = jnp.zeros((HID_PAD, OUT_PAD), jnp.float32).at[:HIDDEN_SIZE, :NUM_CLASSES].set(w2)
    b2p = jnp.zeros((1, OUT_PAD), jnp.float32).at[:, :NUM_CLASSES].set(b2)
    return w1p.astype(jnp.bfloat16), b1p, w2p.astype(jnp.bfloat16), b2p


def net_forward(x, w1p, b1p, w2p, b2p, *, block_b=128):
    """x: (B, 268) f32. Returns softmax probabilities (B, 2) f32."""
    B = x.shape[0]
    tb = min(block_b, _round_up(B, 8))       # sublane-aligned batch tile
    B_pad = _round_up(B, tb)

    # Zero-pad batch and feature axes, cast input to bf16 (halves x DMA; zeros stay zeros).
    x_p = jnp.zeros((B_pad, IN_PAD), jnp.float32).at[:B, :INPUT_SIZE].set(x)
    x_p = x_p.astype(jnp.bfloat16)

    out = pl.pallas_call(
        _mlp_kernel,
        out_shape=jax.ShapeDtypeStruct((B_pad, OUT_PAD), jnp.float32),
        grid=(pl.cdiv(B_pad, tb),),
        in_specs=[
            pl.BlockSpec((tb, IN_PAD), lambda i: (i, 0)),        # x: tiled over batch
            pl.BlockSpec((IN_PAD, HID_PAD), lambda i: (0, 0)),   # w1: VMEM-resident
            pl.BlockSpec((1, HID_PAD), lambda i: (0, 0)),        # b1
            pl.BlockSpec((HID_PAD, OUT_PAD), lambda i: (0, 0)),  # w2: VMEM-resident
            pl.BlockSpec((1, OUT_PAD), lambda i: (0, 0)),        # b2
        ],
        out_specs=pl.BlockSpec((tb, OUT_PAD), lambda i: (i, 0)),
        compiler_params=pltpu.CompilerParams(
            # Batch tiles are independent: lets v7x shard them across its 2 TensorCores.
            dimension_semantics=("parallel",),
        ),
    )(x_p, w1p, b1p, w2p, b2p)

    return out[:B, :NUM_CLASSES]


def init_params(key):
    """Mirror the PyTorch module's init: weights ~ N(0, 0.1); biases = default Linear uniform."""
    k1, k2, k3, k4 = jax.random.split(key, 4)
    w1 = 0.1 * jax.random.normal(k1, (INPUT_SIZE, HIDDEN_SIZE), dtype=jnp.float32)
    w2 = 0.1 * jax.random.normal(k2, (HIDDEN_SIZE, NUM_CLASSES), dtype=jnp.float32)
    bound1 = 1.0 / jnp.sqrt(float(INPUT_SIZE))
    bound2 = 1.0 / jnp.sqrt(float(HIDDEN_SIZE))
    b1 = jax.random.uniform(k3, (1, HIDDEN_SIZE), jnp.float32, -bound1, bound1)
    b2 = jax.random.uniform(k4, (1, NUM_CLASSES), jnp.float32, -bound2, bound2)
    return w1, b1, w2, b2


if __name__ == "__main__":
    key = jax.random.PRNGKey(0)
    kx, kp = jax.random.split(key)

    batch = 8
    x = jax.random.normal(kx, (batch, INPUT_SIZE), dtype=jnp.float32)
    w1, b1, w2, b2 = init_params(kp)
    params = prepare_params(w1, b1, w2, b2)

    out = net_forward(x, *params)
    out = jax.block_until_ready(out)

    # Pure-f32 JAX reference of the module's forward pass.
    h_ref = jax.nn.sigmoid(x @ w1 + b1)
    ref = jax.nn.softmax(h_ref @ w2 + b2, axis=-1)

    assert out.shape == (batch, NUM_CLASSES)
    # bf16 MXU inputs + EUP approx reciprocal => compare at bf16-level tolerance.
    assert jnp.allclose(out, ref, atol=3e-2)
    assert jnp.allclose(jnp.sum(out, axis=-1), 1.0, atol=1e-5)

    print("KERNEL_OK")
</pallas_src>

<mosaic_0001>
module attributes {stable_mosaic.version = 11 : i64} {
  func.func @_mlp_kernel(%arg0: i32, %arg1: memref<8x272xbf16, #tpu.memory_space<vmem>>, %arg2: memref<272x1536xbf16, #tpu.memory_space<vmem>>, %arg3: memref<1x1536xf32, #tpu.memory_space<vmem>>, %arg4: memref<1536x128xbf16, #tpu.memory_space<vmem>>, %arg5: memref<1x128xf32, #tpu.memory_space<vmem>>, %arg6: memref<8x128xf32, #tpu.memory_space<vmem>>) attributes {dimension_semantics = [#tpu.dimension_semantics<parallel>], iteration_bounds = array<i64: 1>, scalar_prefetch = 0 : i64, scratch_operands = 0 : i64, tpu.core_type = #tpu.core_type<tc>, window_params = [{transform_indices = @transform_0, window_bounds = array<i64: 8, 272>}, {pipeline_mode = #tpu.pipeline_mode<synchronous>, transform_indices = @transform_1, window_bounds = array<i64: 272, 1536>}, {pipeline_mode = #tpu.pipeline_mode<synchronous>, transform_indices = @transform_2, window_bounds = array<i64: 1, 1536>}, {pipeline_mode = #tpu.pipeline_mode<synchronous>, transform_indices = @transform_3, window_bounds = array<i64: 1536, 128>}, {pipeline_mode = #tpu.pipeline_mode<synchronous>, transform_indices = @transform_4, window_bounds = array<i64: 1, 128>}, {transform_indices = @transform_5, window_bounds = array<i64: 8, 128>}]} {
    %c0 = arith.constant 0 : index
    %c0_0 = arith.constant 0 : index
    %0 = vector.load %arg1[%c0, %c0_0] : memref<8x272xbf16, #tpu.memory_space<vmem>>, vector<8x272xbf16>
    %c0_1 = arith.constant 0 : index
    %c0_2 = arith.constant 0 : index
    %1 = vector.load %arg2[%c0_1, %c0_2] : memref<272x1536xbf16, #tpu.memory_space<vmem>>, vector<272x1536xbf16>
    %cst = arith.constant dense<0.000000e+00> : vector<8x1536xf32>
    %2 = tpu.matmul %0, %1, %cst {dimension_numbers = #tpu.dot_dimension_numbers<[1], [0], [0], [1], [0, 0, 1, 1], [], []>} : vector<8x272xbf16>, vector<272x1536xbf16>, vector<8x1536xf32> -> vector<8x1536xf32>
    %c0_3 = arith.constant 0 : index
    %c0_4 = arith.constant 0 : index
    %3 = vector.load %arg3[%c0_3, %c0_4] : memref<1x1536xf32, #tpu.memory_space<vmem>>, vector<1x1536xf32>
    %4 = vector.broadcast %3 : vector<1x1536xf32> to vector<8x1536xf32>
    %5 = arith.addf %2, %4 : vector<8x1536xf32>
    %cst_5 = arith.constant 0.000000e+00 : f32
    %6 = vector.broadcast %cst_5 : f32 to vector<8x1536xf32>
    %7 = arith.subf %6, %5 : vector<8x1536xf32>
    %8 = math.exp %7 : vector<8x1536xf32>
    %cst_6 = arith.constant 1.000000e+00 : f32
    %9 = vector.broadcast %cst_6 : f32 to vector<8x1536xf32>
    %10 = arith.addf %9, %8 : vector<8x1536xf32>
    %11 = tpu.reciprocal %10 {approx = true} : vector<8x1536xf32> -> vector<8x1536xf32>
    %12 = arith.truncf %11 : vector<8x1536xf32> to vector<8x1536xbf16>
    %c0_7 = arith.constant 0 : index
    %c0_8 = arith.constant 0 : index
    %13 = vector.load %arg4[%c0_7, %c0_8] : memref<1536x128xbf16, #tpu.memory_space<vmem>>, vector<1536x128xbf16>
    %cst_9 = arith.constant dense<0.000000e+00> : vector<8x128xf32>
    %14 = tpu.matmul %12, %13, %cst_9 {dimension_numbers = #tpu.dot_dimension_numbers<[1], [0], [0], [1], [0, 0, 1, 1], [], []>} : vector<8x1536xbf16>, vector<1536x128xbf16>, vector<8x128xf32> -> vector<8x128xf32>
    %c0_10 = arith.constant 0 : index
    %c0_11 = arith.constant 0 : index
    %15 = vector.load %arg5[%c0_10, %c0_11] : memref<1x128xf32, #tpu.memory_space<vmem>>, vector<1x128xf32>
    %16 = vector.broadcast %15 : vector<1x128xf32> to vector<8x128xf32>
    %17 = arith.addf %14, %16 : vector<8x128xf32>
    %18 = vector.extract_strided_slice %17 {offsets = [0, 0], sizes = [8, 1], strides = [1, 1]} : vector<8x128xf32> to vector<8x1xf32>
    %19 = vector.extract_strided_slice %17 {offsets = [0, 1], sizes = [8, 1], strides = [1, 1]} : vector<8x128xf32> to vector<8x1xf32>
    %20 = arith.subf %18, %19 : vector<8x1xf32>
    %cst_12 = arith.constant 0.000000e+00 : f32
    %21 = vector.broadcast %cst_12 : f32 to vector<8x1xf32>
    %22 = arith.subf %21, %20 : vector<8x1xf32>
    %23 = math.exp %22 : vector<8x1xf32>
    %cst_13 = arith.constant 1.000000e+00 : f32
    %24 = vector.broadcast %cst_13 : f32 to vector<8x1xf32>
    %25 = arith.addf %24, %23 : vector<8x1xf32>
    %26 = tpu.reciprocal %25 {approx = true} : vector<8x1xf32> -> vector<8x1xf32>
    %cst_14 = arith.constant 1.000000e+00 : f32
    %27 = vector.broadcast %cst_14 : f32 to vector<8x1xf32>
    %28 = arith.subf %27, %26 : vector<8x1xf32>
    %29 = tpu.iota {dimensions = array<i32: 1>} : vector<8x128xi32>
    %c0_i32 = arith.constant 0 : i32
    %30 = vector.broadcast %c0_i32 : i32 to vector<8x128xi32>
    %31 = arith.cmpi eq, %29, %30 : vector<8x128xi32>
    %c1_i32 = arith.constant 1 : i32
    %32 = vector.broadcast %c1_i32 : i32 to vector<8x128xi32>
    %33 = arith.cmpi eq, %29, %32 : vector<8x128xi32>
    %cst_15 = arith.constant 0.000000e+00 : f32
    %34 = vector.shape_cast %28 : vector<8x1xf32> to vector<8x1xf32>
    %35 = vector.broadcast %34 : vector<8x1xf32> to vector<8x128xf32>
    %36 = vector.broadcast %cst_15 : f32 to vector<8x128xf32>
    %37 = arith.select %33, %35, %36 : vector<8x128xi1>, vector<8x128xf32>
    %38 = vector.shape_cast %26 : vector<8x1xf32> to vector<8x1xf32>
    %39 = vector.broadcast %38 : vector<8x1xf32> to vector<8x128xf32>
    %40 = arith.select %31, %39, %37 : vector<8x128xi1>, vector<8x128xf32>
    %c0_16 = arith.constant 0 : index
    %c0_17 = arith.constant 0 : index
    %41 = vector.load %arg6[%c0_16, %c0_17] : memref<8x128xf32, #tpu.memory_space<vmem>>, vector<8x128xf32>
    tpu.vector_store %arg6[%c0_16, %c0_17], %40 {strides = array<i32>} : memref<8x128xf32, #tpu.memory_space<vmem>>, vector<8x128xf32>,
    return
  }
  func.func @transform_0(%arg0: i32) -> (i32, i32) {
    %c0_i32 = arith.constant 0 : i32
    %c0_i32_0 = arith.constant 0 : i32
    return %arg0, %c0_i32 : i32, i32
  }
  func.func @transform_1(%arg0: i32) -> (i32, i32) {
    %c0_i32 = arith.constant 0 : i32
    %c0_i32_0 = arith.constant 0 : i32
    %c0_i32_1 = arith.constant 0 : i32
    return %c0_i32, %c0_i32_0 : i32, i32
  }
  func.func @transform_2(%arg0: i32) -> (i32, i32) {
    %c0_i32 = arith.constant 0 : i32
    %c0_i32_0 = arith.constant 0 : i32
    %c0_i32_1 = arith.constant 0 : i32
    return %c0_i32, %c0_i32_0 : i32, i32
  }
  func.func @transform_3(%arg0: i32) -> (i32, i32) {
    %c0_i32 = arith.constant 0 : i32
    %c0_i32_0 = arith.constant 0 : i32
    %c0_i32_1 = arith.constant 0 : i32
    return %c0_i32, %c0_i32_0 : i32, i32
  }
  func.func @transform_4(%arg0: i32) -> (i32, i32) {
    %c0_i32 = arith.constant 0 : i32
    %c0_i32_0 = arith.constant 0 : i32
    %c0_i32_1 = arith.constant 0 : i32
    return %c0_i32, %c0_i32_0 : i32, i32
  }
  func.func @transform_5(%arg0: i32) -> (i32, i32) {
    %c0_i32 = arith.constant 0 : i32
    %c0_i32_0 = arith.constant 0 : i32
    return %arg0, %c0_i32 : i32, i32
  }
}

</mosaic_0001>

<llo_original>
// kernel: tpu_custom_call.1
$region0: #{tpu_custom_call.1}
  #allocation0 [shape = 'u32[]', space=smem, size = 0x4, offset = 0x4, fixed_abs, tag = 'smem constant byte address 0x4 - core index']
  #allocation1 [shape = 'u32[144,128]{1,0:T(1,128)}', space=vmem, size = 0x12000, scoped, tag = 'internal scratch']
  %s0 = inlined_call_operand.hbm [shape: bf16[8,272], index: 0, kind: input, shape index: {}]
  %s1 = inlined_call_operand.hbm [shape: bf16[272,1536], index: 1, kind: input, shape index: {}]
  %s2 = inlined_call_operand.hbm [shape: f32[1,1536], index: 2, kind: input, shape index: {}]
  %s3 = inlined_call_operand.hbm [shape: bf16[1536,128], index: 3, kind: input, shape index: {}]
  %s4 = inlined_call_operand.vmem [shape: f32[1,128], index: 4, kind: input, shape index: {}]
  %s5 = inlined_call_operand.hbm [shape: f32[8,128], index: 5, kind: output, shape index: {}]
  %s6 = sld [smem:[#allocation0]]
  $region46: #{tpu_custom_call.1} parent=0
    _
  %s8 = ssub.s32 1, %s6
  %s9 = scalar_select 0, %s8, %s6
  $region1: #{tpu_custom_call.1} parent=0
    #allocation2 [shape = 'u8[6144]{0}', space=vmem, size = 0x1800, scoped, tag = 'input window, operand 0, single buffered']
    #allocation3 [shape = 's32[1]{0}', space=sflag, size = 0x4, scoped, tag = 'scoped memory for tpu_custom_call.1']
    #allocation4 [shape = 's32[1]{0}', space=sflag, size = 0x4, scoped, tag = 'scoped memory for tpu_custom_call.1']
    #allocation5 [shape = 'u8[835584]{0}', space=vmem, size = 0xcc000, scoped, tag = 'input window, operand 1, single buffered']
    #allocation6 [shape = 's32[1]{0}', space=sflag, size = 0x4, scoped, tag = 'scoped memory for tpu_custom_call.1']
    #allocation7 [shape = 'u8[6144]{0}', space=vmem, size = 0x1800, scoped, tag = 'input window, operand 2, single buffered']
    #allocation8 [shape = 'u8[393216]{0}', space=vmem, size = 0x60000, scoped, tag = 'input window, operand 3, single buffered']
    #allocation9 [shape = 's32[1]{0}', space=sflag, size = 0x4, scoped, tag = 'scoped memory for tpu_custom_call.1']
    #allocation10 [shape = 'u8[4096]{0}', space=vmem, size = 0x1000, scoped, tag = 'output window, operand 0, single buffered']
    %10 = vsyncpa [#allocation3], 0
    %11 = vsyncpa [#allocation6], 0
    %12 = vsyncpa [#allocation9], 0
    %13 = vsyncpa [#allocation4], 0
    // Predicated region
    $region2: #{tpu_custom_call.1} parent=1 // pred_check
      _
    $region3: #{tpu_custom_call.1} parent=1 // pred_check_branch
      %15 = sbr.rel (0) target = $region5
    $region4: #{tpu_custom_call.1} parent=1 // pred_region
      %s17 = ssub.s32 192, 192
      %18 = vsyncadd [#allocation3], %s17
      %s20 = sshll.u32 [#allocation2], 4
      %s21 = int_to_ptr.vmem [resolvable:$true] %s20
      %23 = dma.hbm_to_vmem [thread:$0]  %s0, 192, %s21, [#allocation3]
    $region5: #{tpu_custom_call.1} parent=1 // pred_fallthru
      _
    // Predicated region
    $region6: #{tpu_custom_call.1} parent=1 // pred_check
      _
    $region7: #{tpu_custom_call.1} parent=1 // pred_check_branch
      %25 = sbr.rel (0) target = $region9
    $region8: #{tpu_custom_call.1} parent=1 // pred_region
      %s27 = ssub.s32 26112, 26112
      %28 = vsyncadd [#allocation6], %s27
      %s29 = sshll.u32 [#allocation5], 4
      %s30 = int_to_ptr.vmem [resolvable:$true] %s29
      %35 = dma.hbm_to_vmem [thread:$0]  %s1, 26112, %s30, [#allocation6], 768, 768, 48
    $region9: #{tpu_custom_call.1} parent=1 // pred_fallthru
      _
    // Predicated region
    $region10: #{tpu_custom_call.1} parent=1 // pred_check
      _
    $region11: #{tpu_custom_call.1} parent=1 // pred_check_branch
      %37 = sbr.rel (0) target = $region13
    $region12: #{tpu_custom_call.1} parent=1 // pred_region
      %s39 = ssub.s32 192, 192
      %40 = vsyncadd [#allocation6], %s39
      %s42 = sshll.u32 [#allocation7], 4
      %s43 = int_to_ptr.vmem [resolvable:$true] %s42
      %45 = dma.hbm_to_vmem [thread:$0]  %s2, 192, %s43, [#allocation6]
    $region13: #{tpu_custom_call.1} parent=1 // pred_fallthru
      _
    // Predicated region
    $region14: #{tpu_custom_call.1} parent=1 // pred_check
      _
    $region15: #{tpu_custom_call.1} parent=1 // pred_check_branch
      %47 = sbr.rel (0) target = $region17
    $region16: #{tpu_custom_call.1} parent=1 // pred_region
      %s49 = ssub.s32 12288, 12288
      %50 = vsyncadd [#allocation9], %s49
      %s51 = sshll.u32 [#allocation8], 4
      %s52 = int_to_ptr.vmem [resolvable:$true] %s51
      %57 = dma.hbm_to_vmem [thread:$0]  %s3, 12288, %s52, [#allocation9], 64, 64, 4
    $region17: #{tpu_custom_call.1} parent=1 // pred_fallthru
      _
    // Predicated region
    $region18: #{tpu_custom_call.1} parent=1 // pred_check
      _
    $region19: #{tpu_custom_call.1} parent=1 // pred_check_branch
      %59 = sbr.rel (0) target = $region21
    $region20: #{tpu_custom_call.1} parent=1 // pred_region
      _
    $region21: #{tpu_custom_call.1} parent=1 // pred_fallthru
      _
    // Predicated region
    $region22: #{tpu_custom_call.1} parent=1 // pred_check
      _
    $region23: #{tpu_custom_call.1} parent=1 // pred_check_branch
      %61 = sbr.rel (0) target = $region25
    $region24: #{tpu_custom_call.1} parent=1 // pred_region
      %62 = dma.done [#allocation3], 192
    $region25: #{tpu_custom_call.1} parent=1 // pred_fallthru
      _
    // Predicated region
    $region26: #{tpu_custom_call.1} parent=1 // pred_check
      _
    $region27: #{tpu_custom_call.1} parent=1 // pred_check_branch
      %64 = sbr.rel (0) target = $region29
    $region28: #{tpu_custom_call.1} parent=1 // pred_region
      %65 = dma.done [#allocation6], 26112
    $region29: #{tpu_custom_call.1} parent=1 // pred_fallthru
      _
    // Predicated region
    $region30: #{tpu_custom_call.1} parent=1 // pred_check
      _
    $region31: #{tpu_custom_call.1} parent=1 // pred_check_branch
      %67 = sbr.rel (0) target = $region33
    $region32: #{tpu_custom_call.1} parent=1 // pred_region
      %68 = dma.done [#allocation6], 192
    $region33: #{tpu_custom_call.1} parent=1 // pred_fallthru
      _
    // Predicated region
    $region34: #{tpu_custom_call.1} parent=1 // pred_check
      _
    $region35: #{tpu_custom_call.1} parent=1 // pred_check_branch
      %70 = sbr.rel (0) target = $region37
    $region36: #{tpu_custom_call.1} parent=1 // pred_region
      %71 = dma.done [#allocation9], 12288
    $region37: #{tpu_custom_call.1} parent=1 // pred_fallthru
      _
    %v73 = vld [vmem:[#allocation2] sm:$0xff]
    %v74 = vld [vmem:[#allocation2 + $0x8] sm:$0xf]
    %v75 = vld [vmem:[#allocation5] sm:$0xff]
    %v76 = vld [vmem:[#allocation5 + $0x8] sm:$0xff]
    %v77 = vld [vmem:[#allocation5 + $0x10] sm:$0xff]
    %v78 = vld [vmem:[#allocation5 + $0x18] sm:$0xff]
    %v79 = vld [vmem:[#allocation5 + $0x20] sm:$0xff]
    %v80 = vld [vmem:[#allocation5 + $0x28] sm:$0xff]
    %v81 = vld [vmem:[#allocation5 + $0x30] sm:$0xff]
    %v82 = vld [vmem:[#allocation5 + $0x38] sm:$0xff]
    %v83 = vld [vmem:[#allocation5 + $0x40] sm:$0xff]
    %v84 = vld [vmem:[#allocation5 + $0x48] sm:$0xff]
    %v85 = vld [vmem:[#allocation5 + $0x50] sm:$0xff]
    %v86 = vld [vmem:[#allocation5 + $0x58] sm:$0xff]
    %v87 = vld [vmem:[#allocation5 + $0x60] sm:$0xff]
    %v88 = vld [vmem:[#allocation5 + $0x68] sm:$0xff]
    %v89 = vld [vmem:[#allocation5 + $0x70] sm:$0xff]
    %v90 = vld [vmem:[#allocation5 + $0x78] sm:$0xff]
    %v91 = vld [vmem:[#allocation5 + $0x80] sm:$0xff]
    %v92 = vld [vmem:[#allocation5 + $0x88] sm:$0xff]
    %v93 = vld [vmem:[#allocation5 + $0x90] sm:$0xff]
    %v94 = vld [vmem:[#allocation5 + $0x98] sm:$0xff]
    %v95 = vld [vmem:[#allocation5 + $0xa0] sm:$0xff]
    %v96 = vld [vmem:[#allocation5 + $0xa8] sm:$0xff]
    %v97 = vld [vmem:[#allocation5 + $0xb0] sm:$0xff]
    %v98 = vld [vmem:[#allocation5 + $0xb8] sm:$0xff]
    %v99 = vld [vmem:[#allocation5 + $0xc0] sm:$0xff]
    %v100 = vld [vmem:[#allocation5 + $0xc8] sm:$0xff]
    %v101 = vld [vmem:[#allocation5 + $0xd0] sm:$0xff]
    %v102 = vld [vmem:[#allocation5 + $0xd8] sm:$0xff]
    %v103 = vld [vmem:[#allocation5 + $0xe0] sm:$0xff]
    %v104 = vld [vmem:[#allocation5 + $0xe8] sm:$0xff]
    %v105 = vld [vmem:[#allocation5 + $0xf0] sm:$0xff]
    %v106 = vld [vmem:[#allocation5 + $0xf8] sm:$0xff]
    %v107 = vld [vmem:[#allocation5 + $0x100] sm:$0xff]
    %v108 = vld [vmem:[#allocation5 + $0x108] sm:$0xff]
    %v109 = vld [vmem:[#allocation5 + $0x110] sm:$0xff]
    %v110 = vld [vmem:[#allocation5 + $0x118] sm:$0xff]
    %v111 = vld [vmem:[#allocation5 + $0x120] sm:$0xff]
    %v112 = vld [vmem:[#allocation5 + $0x128] sm:$0xff]
    %v113 = vld [vmem:[#allocation5 + $0x130] sm:$0xff]
    %v114 = vld [vmem:[#allocation5 + $0x138] sm:$0xff]
    %v115 = vld [vmem:[#allocation5 + $0x140] sm:$0xff]
    %v116 = vld [vmem:[#allocation5 + $0x148] sm:$0xff]
    %v117 = vld [vmem:[#allocation5 + $0x150] sm:$0xff]
    %v118 = vld [vmem:[#allocation5 + $0x158] sm:$0xff]
    %v119 = vld [vmem:[#allocation5 + $0x160] sm:$0xff]
    %v120 = vld [vmem:[#allocation5 + $0x168] sm:$0xff]
    %v121 = vld [vmem:[#allocation5 + $0x170] sm:$0xff]
    %v122 = vld [vmem:[#allocation5 + $0x178] sm:$0xff]
    %v123 = vld [vmem:[#allocation5 + $0x180] sm:$0xff]
    %v124 = vld [vmem:[#allocation5 + $0x188] sm:$0xff]
    %v125 = vld [vmem:[#allocation5 + $0x190] sm:$0xff]
    %v126 = vld [vmem:[#allocation5 + $0x198] sm:$0xff]
    %v127 = vld [vmem:[#allocation5 + $0x1a0] sm:$0xff]
    %v128 = vld [vmem:[#allocation5 + $0x1a8] sm:$0xff]
    %v129 = vld [vmem:[#allocation5 + $0x1b0] sm:$0xff]
    %v130 = vld [vmem:[#allocation5 + $0x1b8] sm:$0xff]
    %v131 = vld [vmem:[#allocation5 + $0x1c0] sm:$0xff]
    %v132 = vld [vmem:[#allocation5 + $0x1c8] sm:$0xff]
    %v133 = vld [vmem:[#allocation5 + $0x1d0] sm:$0xff]
    %v134 = vld [vmem:[#allocation5 + $0x1d8] sm:$0xff]
    %v135 = vld [vmem:[#allocation5 + $0x1e0] sm:$0xff]
    %v136 = vld [vmem:[#allocation5 + $0x1e8] sm:$0xff]
    %v137 = vld [vmem:[#allocation5 + $0x1f0] sm:$0xff]
    %v138 = vld [vmem:[#allocation5 + $0x1f8] sm:$0xff]
    %v139 = vld [vmem:[#allocation5 + $0x200] sm:$0xff]
    %v140 = vld [vmem:[#allocation5 + $0x208] sm:$0xff]
    %v141 = vld [vmem:[#allocation5 + $0x210] sm:$0xff]
    %v142 = vld [vmem:[#allocation5 + $0x218] sm:$0xff]
    %v143 = vld [vmem:[#allocation5 + $0x220] sm:$0xff]
    %v144 = vld [vmem:[#allocation5 + $0x228] sm:$0xff]
    %v145 = vld [vmem:[#allocation5 + $0x230] sm:$0xff]
    %v146 = vld [vmem:[#allocation5 + $0x238] sm:$0xff]
    %v147 = vld [vmem:[#allocation5 + $0x240] sm:$0xff]
    %v148 = vld [vmem:[#allocation5 + $0x248] sm:$0xff]
    %v149 = vld [vmem:[#allocation5 + $0x250] sm:$0xff]
    %v150 = vld [vmem:[#allocation5 + $0x258] sm:$0xff]
    %v151 = vld [vmem:[#allocation5 + $0x260] sm:$0xff]
    %v152 = vld [vmem:[#allocation5 + $0x268] sm:$0xff]
    %v153 = vld [vmem:[#allocation5 + $0x270] sm:$0xff]
    %v154 = vld [vmem:[#allocation5 + $0x278] sm:$0xff]
    %v155 = vld [vmem:[#allocation5 + $0x280] sm:$0xff]
    %v156 = vld [vmem:[#allocation5 + $0x288] sm:$0xff]
    %v157 = vld [vmem:[#allocation5 + $0x290] sm:$0xff]
    %v158 = vld [vmem:[#allocation5 + $0x298] sm:$0xff]
    %v159 = vld [vmem:[#allocation5 + $0x2a0] sm:$0xff]
    %v160 = vld [vmem:[#allocation5 + $0x2a8] sm:$0xff]
    %v161 = vld [vmem:[#allocation5 + $0x2b0] sm:$0xff]
    %v162 = vld [vmem:[#allocation5 + $0x2b8] sm:$0xff]
    %v163 = vld [vmem:[#allocation5 + $0x2c0] sm:$0xff]
    %v164 = vld [vmem:[#allocation5 + $0x2c8] sm:$0xff]
    %v165 = vld [vmem:[#allocation5 + $0x2d0] sm:$0xff]
    %v166 = vld [vmem:[#allocation5 + $0x2d8] sm:$0xff]
    %v167 = vld [vmem:[#allocation5 + $0x2e0] sm:$0xff]
    %v168 = vld [vmem:[#allocation5 + $0x2e8] sm:$0xff]
    %v169 = vld [vmem:[#allocation5 + $0x2f0] sm:$0xff]
    %v170 = vld [vmem:[#allocation5 + $0x2f8] sm:$0xff]
    %v171 = vld [vmem:[#allocation5 + $0x300] sm:$0xff]
    %v172 = vld [vmem:[#allocation5 + $0x308] sm:$0xff]
    %v173 = vld [vmem:[#allocation5 + $0x310] sm:$0xff]
    %v174 = vld [vmem:[#allocation5 + $0x318] sm:$0xff]
    %v175 = vld [vmem:[#allocation5 + $0x320] sm:$0xff]
    %v176 = vld [vmem:[#allocation5 + $0x328] sm:$0xff]
    %v177 = vld [vmem:[#allocation5 + $0x330] sm:$0xff]
    %v178 = vld [vmem:[#allocation5 + $0x338] sm:$0xff]
    %v179 = vld [vmem:[#allocation5 + $0x340] sm:$0xff]
    %v180 = vld [vmem:[#allocation5 + $0x348] sm:$0xff]
    %v181 = vld [vmem:[#allocation5 + $0x350] sm:$0xff]
    %v182 = vld [vmem:[#allocation5 + $0x358] sm:$0xff]
    %v183 = vld [vmem:[#allocation5 + $0x360] sm:$0xff]
    %v184 = vld [vmem:[#allocation5 + $0x368] sm:$0xff]
    %v185 = vld [vmem:[#allocation5 + $0x370] sm:$0xff]
    %v186 = vld [vmem:[#allocation5 + $0x378] sm:$0xff]
    %v187 = vld [vmem:[#allocation5 + $0x380] sm:$0xff]
    %v188 = vld [vmem:[#allocation5 + $0x388] sm:$0xff]
    %v189 = vld [vmem:[#allocation5 + $0x390] sm:$0xff]
    %v190 = vld [vmem:[#allocation5 + $0x398] sm:$0xff]
    %v191 = vld [vmem:[#allocation5 + $0x3a0] sm:$0xff]
    %v192 = vld [vmem:[#allocation5 + $0x3a8] sm:$0xff]
    %v193 = vld [vmem:[#allocation5 + $0x3b0] sm:$0xff]
    %v194 = vld [vmem:[#allocation5 + $0x3b8] sm:$0xff]
    %v195 = vld [vmem:[#allocation5 + $0x3c0] sm:$0xff]
    %v196 = vld [vmem:[#allocation5 + $0x3c8] sm:$0xff]
    %v197 = vld [vmem:[#allocation5 + $0x3d0] sm:$0xff]
    %v198 = vld [vmem:[#allocation5 + $0x3d8] sm:$0xff]
    %v199 = vld [vmem:[#allocation5 + $0x3e0] sm:$0xff]
    %v200 = vld [vmem:[#allocation5 + $0x3e8] sm:$0xff]
    %v201 = vld [vmem:[#allocation5 + $0x3f0] sm:$0xff]
    %v202 = vld [vmem:[#allocation5 + $0x3f8] sm:$0xff]
    %v203 = vld [vmem:[#allocation5 + $0x400] sm:$0xff]
    %v204 = vld [vmem:[#allocation5 + $0x408] sm:$0xff]
    %v205 = vld [vmem:[#allocation5 + $0x410] sm:$0xff]
    %v206 = vld [vmem:[#allocation5 + $0x418] sm:$0xff]
    %v207 = vld [vmem:[#allocation5 + $0x420] sm:$0xff]
    %v208 = vld [vmem:[#allocation5 + $0x428] sm:$0xff]
    %v209 = vld [vmem:[#allocation5 + $0x430] sm:$0xff]
    %v210 = vld [vmem:[#allocation5 + $0x438] sm:$0xff]
    %v211 = vld [vmem:[#allocation5 + $0x440] sm:$0xff]
    %v212 = vld [vmem:[#allocation5 + $0x448] sm:$0xff]
    %v213 = vld [vmem:[#allocation5 + $0x450] sm:$0xff]
    %v214 = vld [vmem:[#allocation5 + $0x458] sm:$0xff]
    %v215 = vld [vmem:[#allocation5 + $0x460] sm:$0xff]
    %v216 = vld [vmem:[#allocation5 + $0x468] sm:$0xff]
    %v217 = vld [vmem:[#allocation5 + $0x470] sm:$0xff]
    %v218 = vld [vmem:[#allocation5 + $0x478] sm:$0xff]
    %v219 = vld [vmem:[#allocation5 + $0x480] sm:$0xff]
    %v220 = vld [vmem:[#allocation5 + $0x488] sm:$0xff]
    %v221 = vld [vmem:[#allocation5 + $0x490] sm:$0xff]
    %v222 = vld [vmem:[#allocation5 + $0x498] sm:$0xff]
    %v223 = vld [vmem:[#allocation5 + $0x4a0] sm:$0xff]
    %v224 = vld [vmem:[#allocation5 + $0x4a8] sm:$0xff]
    %v225 = vld [vmem:[#allocation5 + $0x4b0] sm:$0xff]
    %v226 = vld [vmem:[#allocation5 + $0x4b8] sm:$0xff]
    %v227 = vld [vmem:[#allocation5 + $0x4c0] sm:$0xff]
    %v228 = vld [vmem:[#allocation5 + $0x4c8] sm:$0xff]
    %v229 = vld [vmem:[#allocation5 + $0x4d0] sm:$0xff]
    %v230 = vld [vmem:[#allocation5 + $0x4d8] sm:$0xff]
    %v231 = vld [vmem:[#allocation5 + $0x4e0] sm:$0xff]
    %v232 = vld [vmem:[#allocation5 + $0x4e8] sm:$0xff]
    %v233 = vld [vmem:[#allocation5 + $0x4f0] sm:$0xff]
    %v234 = vld [vmem:[#allocation5 + $0x4f8] sm:$0xff]
    %v235 = vld [vmem:[#allocation5 + $0x500] sm:$0xff]
    %v236 = vld [vmem:[#allocation5 + $0x508] sm:$0xff]
    %v237 = vld [vmem:[#allocation5 + $0x510] sm:$0xff]
    %v238 = vld [vmem:[#allocation5 + $0x518] sm:$0xff]
    %v239 = vld [vmem:[#allocation5 + $0x520] sm:$0xff]
    %v240 = vld [vmem:[#allocation5 + $0x528] sm:$0xff]
    %v241 = vld [vmem:[#allocation5 + $0x530] sm:$0xff]
    %v242 = vld [vmem:[#allocation5 + $0x538] sm:$0xff]
    %v243 = vld [vmem:[#allocation5 + $0x540] sm:$0xff]
    %v244 = vld [vmem:[#allocation5 + $0x548] sm:$0xff]
    %v245 = vld [vmem:[#allocation5 + $0x550] sm:$0xff]
    %v246 = vld [vmem:[#allocation5 + $0x558] sm:$0xff]
    %v247 = vld [vmem:[#allocation5 + $0x560] sm:$0xff]
    %v248 = vld [vmem:[#allocation5 + $0x568] sm:$0xff]
    %v249 = vld [vmem:[#allocation5 + $0x570] sm:$0xff]
    %v250 = vld [vmem:[#allocation5 + $0x578] sm:$0xff]
    %v251 = vld [vmem:[#allocation5 + $0x580] sm:$0xff]
    %v252 = vld [vmem:[#allocation5 + $0x588] sm:$0xff]
    %v253 = vld [vmem:[#allocation5 + $0x590] sm:$0xff]
    %v254 = vld [vmem:[#allocation5 + $0x598] sm:$0xff]
    %v255 = vld [vmem:[#allocation5 + $0x5a0] sm:$0xff]
    %v256 = vld [vmem:[#allocation5 + $0x5a8] sm:$0xff]
    %v257 = vld [vmem:[#allocation5 + $0x5b0] sm:$0xff]
    %v258 = vld [vmem:[#allocation5 + $0x5b8] sm:$0xff]
    %v259 = vld [vmem:[#allocation5 + $0x5c0] sm:$0xff]
    %v260 = vld [vmem:[#allocation5 + $0x5c8] sm:$0xff]
    %v261 = vld [vmem:[#allocation5 + $0x5d0] sm:$0xff]
    %v262 = vld [vmem:[#allocation5 + $0x5d8] sm:$0xff]
    %v263 = vld [vmem:[#allocation5 + $0x5e0] sm:$0xff]
    %v264 = vld [vmem:[#allocation5 + $0x5e8] sm:$0xff]
    %v265 = vld [vmem:[#allocation5 + $0x5f0] sm:$0xff]
    %v266 = vld [vmem:[#allocation5 + $0x5f8] sm:$0xff]
    %v267 = vld [vmem:[#allocation5 + $0x600] sm:$0xff]
    %v268 = vld [vmem:[#allocation5 + $0x608] sm:$0xff]
    %v269 = vld [vmem:[#allocation5 + $0x610] sm:$0xff]
    %v270 = vld [vmem:[#allocation5 + $0x618] sm:$0xff]
    %v271 = vld [vmem:[#allocation5 + $0x620] sm:$0xff]
    %v272 = vld [vmem:[#allocation5 + $0x628] sm:$0xff]
    %v273 = vld [vmem:[#allocation5 + $0x630] sm:$0xff]
    %v274 = vld [vmem:[#allocation5 + $0x638] sm:$0xff]
    %v275 = vld [vmem:[#allocation5 + $0x640] sm:$0xff]
    %v276 = vld [vmem:[#allocation5 + $0x648] sm:$0xff]
    %v277 = vld [vmem:[#allocation5 + $0x650] sm:$0xff]
    %v278 = vld [vmem:[#allocation5 + $0x658] sm:$0xff]
    %v279 = vld [vmem:[#allocation7] sm:$0xff]
    %v280 = vld [vmem:[#allocation7 + $0x8] sm:$0xf]
    %v283 = vlaneseq
    %v284 = vshrl.u32 %v283, 7
    %v285 = vsub.s32 0, %v284
    %v286 = vrot.slane %v279, %v285
    %v287 = vlaneseq
    %v288 = vshrl.u32 %v287, 7
    %v289 = vsub.s32 1, %v288
    %v290 = vrot.slane %v279, %v289
    %v291 = vlaneseq
    %v292 = vshrl.u32 %v291, 7
    %v293 = vsub.s32 2, %v292
    %v294 = vrot.slane %v279, %v293
    %v295 = vlaneseq
    %v296 = vshrl.u32 %v295, 7
    %v297 = vsub.s32 3, %v296
    %v298 = vrot.slane %v279, %v297
    %v299 = vlaneseq
    %v300 = vshrl.u32 %v299, 7
    %v301 = vsub.s32 4, %v300
    %v302 = vrot.slane %v279, %v301
    %v303 = vlaneseq
    %v304 = vshrl.u32 %v303, 7
    %v305 = vsub.s32 5, %v304
    %v306 = vrot.slane %v279, %v305
    %v307 = vlaneseq
    %v308 = vshrl.u32 %v307, 7
    %v309 = vsub.s32 6, %v308
    %v310 = vrot.slane %v279, %v309
    %v311 = vlaneseq
    %v312 = vshrl.u32 %v311, 7
    %v313 = vsub.s32 7, %v312
    %v314 = vrot.slane %v279, %v313
    %v315 = vlaneseq
    %v316 = vshrl.u32 %v315, 7
    %v317 = vsub.s32 0, %v316
    %v318 = vrot.slane %v280, %v317
    %v319 = vlaneseq
    %v320 = vshrl.u32 %v319, 7
    %v321 = vsub.s32 1, %v320
    %v322 = vrot.slane %v280, %v321
    %v323 = vlaneseq
    %v324 = vshrl.u32 %v323, 7
    %v325 = vsub.s32 2, %v324
    %v326 = vrot.slane %v280, %v325
    %v327 = vlaneseq
    %v328 = vshrl.u32 %v327, 7
    %v329 = vsub.s32 3, %v328
    %v330 = vrot.slane %v280, %v329
    %v345 = vunpack.c.l.b16 %v73
    %v346 = vunpack.c.h.b16 %v73
    %v347 = vunpack.c.l.b16 %v74
    %v348 = vpack.c.b16 %v345, %v345
    %v349 = vpack.c.b16 %v346, %v346
    %v350 = vpack.c.b16 %v347, %v347
    %v557 = vunpack.c.l.b16 %v75
    %v558 = vunpack.c.h.b16 %v75
    %v559 = vunpack.c.l.b16 %v76
    %v560 = vunpack.c.h.b16 %v76
    %v561 = vunpack.c.l.b16 %v77
    %v562 = vunpack.c.h.b16 %v77
    %v563 = vunpack.c.l.b16 %v78
    %v564 = vunpack.c.h.b16 %v78
    %v565 = vunpack.c.l.b16 %v79
    %v566 = vunpack.c.h.b16 %v79
    %v567 = vunpack.c.l.b16 %v80
    %v568 = vunpack.c.h.b16 %v80
    %v569 = vunpack.c.l.b16 %v81
    %v570 = vunpack.c.h.b16 %v81
    %v571 = vunpack.c.l.b16 %v82
    %v572 = vunpack.c.h.b16 %v82
    %v573 = vunpack.c.l.b16 %v83
    %v574 = vunpack.c.h.b16 %v83
    %v575 = vunpack.c.l.b16 %v84
    %v576 = vunpack.c.h.b16 %v84
    %v577 = vunpack.c.l.b16 %v85
    %v578 = vunpack.c.h.b16 %v85
    %v579 = vunpack.c.l.b16 %v86
    %v580 = vunpack.c.h.b16 %v86
    %v581 = vunpack.c.l.b16 %v87
    %v582 = vunpack.c.h.b16 %v87
    %v583 = vunpack.c.l.b16 %v88
    %v584 = vunpack.c.h.b16 %v88
    %v585 = vunpack.c.l.b16 %v89
    %v586 = vunpack.c.h.b16 %v89
    %v587 = vunpack.c.l.b16 %v90
    %v588 = vunpack.c.h.b16 %v90
    %v589 = vunpack.c.l.b16 %v91
    %v590 = vunpack.c.h.b16 %v91
    %v591 = vunpack.c.l.b16 %v92
    %v592 = vunpack.c.h.b16 %v92
    %v593 = vunpack.c.l.b16 %v93
    %v594 = vunpack.c.h.b16 %v93
    %v595 = vunpack.c.l.b16 %v94
    %v596 = vunpack.c.h.b16 %v94
    %v597 = vunpack.c.l.b16 %v95
    %v598 = vunpack.c.h.b16 %v95
    %v599 = vunpack.c.l.b16 %v96
    %v600 = vunpack.c.h.b16 %v96
    %v601 = vunpack.c.l.b16 %v97
    %v602 = vunpack.c.h.b16 %v97
    %v603 = vunpack.c.l.b16 %v98
    %v604 = vunpack.c.h.b16 %v98
    %v605 = vunpack.c.l.b16 %v99
    %v606 = vunpack.c.h.b16 %v99
    %v607 = vunpack.c.l.b16 %v100
    %v608 = vunpack.c.h.b16 %v100
    %v609 = vunpack.c.l.b16 %v101
    %v610 = vunpack.c.h.b16 %v101
    %v611 = vunpack.c.l.b16 %v102
    %v612 = vunpack.c.h.b16 %v102
    %v613 = vunpack.c.l.b16 %v103
    %v614 = vunpack.c.h.b16 %v103
    %v615 = vunpack.c.l.b16 %v104
    %v616 = vunpack.c.h.b16 %v104
    %v617 = vunpack.c.l.b16 %v105
    %v618 = vunpack.c.h.b16 %v105
    %v619 = vunpack.c.l.b16 %v106
    %v620 = vunpack.c.h.b16 %v106
    %v621 = vunpack.c.l.b16 %v107
    %v622 = vunpack.c.h.b16 %v107
    %v623 = vunpack.c.l.b16 %v108
    %v624 = vunpack.c.h.b16 %v108
    %v625 = vunpack.c.l.b16 %v109
    %v626 = vunpack.c.h.b16 %v109
    %v627 = vunpack.c.l.b16 %v110
    %v628 = vunpack.c.h.b16 %v110
    %v629 = vunpack.c.l.b16 %v111
    %v630 = vunpack.c.h.b16 %v111
    %v631 = vunpack.c.l.b16 %v112
    %v632 = vunpack.c.h.b16 %v112
    %v633 = vunpack.c.l.b16 %v113
    %v634 = vunpack.c.h.b16 %v113
    %v635 = vunpack.c.l.b16 %v114
    %v636 = vunpack.c.h.b16 %v114
    %v637 = vunpack.c.l.b16 %v115
    %v638 = vunpack.c.h.b16 %v115
    %v639 = vunpack.c.l.b16 %v116
    %v640 = vunpack.c.h.b16 %v116
    %v641 = vunpack.c.l.b16 %v117
    %v642 = vunpack.c.h.b16 %v117
    %v643 = vunpack.c.l.b16 %v118
    %v644 = vunpack.c.h.b16 %v118
    %v645 = vunpack.c.l.b16 %v119
    %v646 = vunpack.c.h.b16 %v119
    %v647 = vunpack.c.l.b16 %v120
    %v648 = vunpack.c.h.b16 %v120
    %v649 = vunpack.c.l.b16 %v121
    %v650 = vunpack.c.h.b16 %v121
    %v651 = vunpack.c.l.b16 %v122
    %v652 = vunpack.c.h.b16 %v122
    %v653 = vunpack.c.l.b16 %v123
    %v654 = vunpack.c.h.b16 %v123
    %v655 = vunpack.c.l.b16 %v124
    %v656 = vunpack.c.h.b16 %v124
    %v657 = vunpack.c.l.b16 %v125
    %v658 = vunpack.c.h.b16 %v125
    %v659 = vunpack.c.l.b16 %v126
    %v660 = vunpack.c.h.b16 %v126
    %v661 = vunpack.c.l.b16 %v127
    %v662 = vunpack.c.h.b16 %v127
    %v663 = vunpack.c.l.b16 %v128
    %v664 = vunpack.c.h.b16 %v128
    %v665 = vunpack.c.l.b16 %v129
    %v666 = vunpack.c.h.b16 %v129
    %v667 = vunpack.c.l.b16 %v130
    %v668 = vunpack.c.h.b16 %v130
    %v669 = vunpack.c.l.b16 %v131
    %v670 = vunpack.c.h.b16 %v131
    %v671 = vunpack.c.l.b16 %v132
    %v672 = vunpack.c.h.b16 %v132
    %v673 = vunpack.c.l.b16 %v133
    %v674 = vunpack.c.h.b16 %v133
    %v675 = vunpack.c.l.b16 %v134
    %v676 = vunpack.c.h.b16 %v134
    %v677 = vunpack.c.l.b16 %v135
    %v678 = vunpack.c.h.b16 %v135
    %v679 = vunpack.c.l.b16 %v136
    %v680 = vunpack.c.h.b16 %v136
    %v681 = vunpack.c.l.b16 %v137
    %v682 = vunpack.c.h.b16 %v137
    %v683 = vunpack.c.l.b16 %v138
    %v684 = vunpack.c.h.b16 %v138
    %v685 = vunpack.c.l.b16 %v139
    %v686 = vunpack.c.h.b16 %v139
    %v687 = vunpack.c.l.b16 %v140
    %v688 = vunpack.c.h.b16 %v140
    %v689 = vunpack.c.l.b16 %v141
    %v690 = vunpack.c.h.b16 %v141
    %v691 = vunpack.c.l.b16 %v142
    %v692 = vunpack.c.h.b16 %v142
    %v693 = vunpack.c.l.b16 %v143
    %v694 = vunpack.c.h.b16 %v143
    %v695 = vunpack.c.l.b16 %v144
    %v696 = vunpack.c.h.b16 %v144
    %v697 = vunpack.c.l.b16 %v145
    %v698 = vunpack.c.h.b16 %v145
    %v699 = vunpack.c.l.b16 %v146
    %v700 = vunpack.c.h.b16 %v146
    %v701 = vunpack.c.l.b16 %v147
    %v702 = vunpack.c.h.b16 %v147
    %v703 = vunpack.c.l.b16 %v148
    %v704 = vunpack.c.h.b16 %v148
    %v705 = vunpack.c.l.b16 %v149
    %v706 = vunpack.c.h.b16 %v149
    %v707 = vunpack.c.l.b16 %v150
    %v708 = vunpack.c.h.b16 %v150
    %v709 = vunpack.c.l.b16 %v151
    %v710 = vunpack.c.h.b16 %v151
    %v711 = vunpack.c.l.b16 %v152
    %v712 = vunpack.c.h.b16 %v152
    %v713 = vunpack.c.l.b16 %v153
    %v714 = vunpack.c.h.b16 %v153
    %v715 = vunpack.c.l.b16 %v154
    %v716 = vunpack.c.h.b16 %v154
    %v717 = vunpack.c.l.b16 %v155
    %v718 = vunpack.c.h.b16 %v155
    %v719 = vunpack.c.l.b16 %v156
    %v720 = vunpack.c.h.b16 %v156
    %v721 = vunpack.c.l.b16 %v157
    %v722 = vunpack.c.h.b16 %v157
    %v723 = vunpack.c.l.b16 %v158
    %v724 = vunpack.c.h.b16 %v158
    %v725 = vunpack.c.l.b16 %v159
    %v726 = vunpack.c.h.b16 %v159
    %v727 = vunpack.c.l.b16 %v160
    %v728 = vunpack.c.h.b16 %v160
    %v729 = vunpack.c.l.b16 %v161
    %v730 = vunpack.c.h.b16 %v161
    %v731 = vunpack.c.l.b16 %v162
    %v732 = vunpack.c.h.b16 %v162
    %v733 = vunpack.c.l.b16 %v163
    %v734 = vunpack.c.h.b16 %v163
    %v735 = vunpack.c.l.b16 %v164
    %v736 = vunpack.c.h.b16 %v164
    %v737 = vunpack.c.l.b16 %v165
    %v738 = vunpack.c.h.b16 %v165
    %v739 = vunpack.c.l.b16 %v166
    %v740 = vunpack.c.h.b16 %v166
    %v741 = vunpack.c.l.b16 %v167
    %v742 = vunpack.c.h.b16 %v167
    %v743 = vunpack.c.l.b16 %v168
    %v744 = vunpack.c.h.b16 %v168
    %v745 = vunpack.c.l.b16 %v169
    %v746 = vunpack.c.h.b16 %v169
    %v747 = vunpack.c.l.b16 %v170
    %v748 = vunpack.c.h.b16 %v170
    %v749 = vunpack.c.l.b16 %v171
    %v750 = vunpack.c.h.b16 %v171
    %v751 = vunpack.c.l.b16 %v172
    %v752 = vunpack.c.h.b16 %v172
    %v753 = vunpack.c.l.b16 %v173
    %v754 = vunpack.c.h.b16 %v173
    %v755 = vunpack.c.l.b16 %v174
    %v756 = vunpack.c.h.b16 %v174
    %v757 = vunpack.c.l.b16 %v175
    %v758 = vunpack.c.h.b16 %v175
    %v759 = vunpack.c.l.b16 %v176
    %v760 = vunpack.c.h.b16 %v176
    %v761 = vunpack.c.l.b16 %v177
    %v762 = vunpack.c.h.b16 %v177
    %v763 = vunpack.c.l.b16 %v178
    %v764 = vunpack.c.h.b16 %v178
    %v765 = vunpack.c.l.b16 %v179
    %v766 = vunpack.c.h.b16 %v179
    %v767 = vunpack.c.l.b16 %v180
    %v768 = vunpack.c.h.b16 %v180
    %v769 = vunpack.c.l.b16 %v181
    %v770 = vunpack.c.h.b16 %v181
    %v771 = vunpack.c.l.b16 %v182
    %v772 = vunpack.c.h.b16 %v182
    %v773 = vunpack.c.l.b16 %v183
    %v774 = vunpack.c.h.b16 %v183
    %v775 = vunpack.c.l.b16 %v184
    %v776 = vunpack.c.h.b16 %v184
    %v777 = vunpack.c.l.b16 %v185
    %v778 = vunpack.c.h.b16 %v185
    %v779 = vunpack.c.l.b16 %v186
    %v780 = vunpack.c.h.b16 %v186
    %v781 = vunpack.c.l.b16 %v187
    %v782 = vunpack.c.h.b16 %v187
    %v783 = vunpack.c.l.b16 %v188
    %v784 = vunpack.c.h.b16 %v188
    %v785 = vunpack.c.l.b16 %v189
    %v786 = vunpack.c.h.b16 %v189
    %v787 = vunpack.c.l.b16 %v190
    %v788 = vunpack.c.h.b16 %v190
    %v789 = vunpack.c.l.b16 %v191
    %v790 = vunpack.c.h.b16 %v191
    %v791 = vunpack.c.l.b16 %v192
    %v792 = vunpack.c.h.b16 %v192
    %v793 = vunpack.c.l.b16 %v193
    %v794 = vunpack.c.h.b16 %v193
    %v795 = vunpack.c.l.b16 %v194
    %v796 = vunpack.c.h.b16 %v194
    %v797 = vunpack.c.l.b16 %v195
    %v798 = vunpack.c.h.b16 %v195
    %v799 = vunpack.c.l.b16 %v196
    %v800 = vunpack.c.h.b16 %v196
    %v801 = vunpack.c.l.b16 %v197
    %v802 = vunpack.c.h.b16 %v197
    %v803 = vunpack.c.l.b16 %v198
    %v804 = vunpack.c.h.b16 %v198
    %v805 = vunpack.c.l.b16 %v199
    %v806 = vunpack.c.h.b16 %v199
    %v807 = vunpack.c.l.b16 %v200
    %v808 = vunpack.c.h.b16 %v200
    %v809 = vunpack.c.l.b16 %v201
    %v810 = vunpack.c.h.b16 %v201
    %v811 = vunpack.c.l.b16 %v202
    %v812 = vunpack.c.h.b16 %v202
    %v813 = vunpack.c.l.b16 %v203
    %v814 = vunpack.c.h.b16 %v203
    %v815 = vunpack.c.l.b16 %v204
    %v816 = vunpack.c.h.b16 %v204
    %v817 = vunpack.c.l.b16 %v205
    %v818 = vunpack.c.h.b16 %v205
    %v819 = vunpack.c.l.b16 %v206
    %v820 = vunpack.c.h.b16 %v206
    %v821 = vunpack.c.l.b16 %v207
    %v822 = vunpack.c.h.b16 %v207
    %v823 = vunpack.c.l.b16 %v208
    %v824 = vunpack.c.h.b16 %v208
    %v825 = vunpack.c.l.b16 %v209
    %v826 = vunpack.c.h.b16 %v209
    %v827 = vunpack.c.l.b16 %v210
    %v828 = vunpack.c.h.b16 %v210
    %v829 = vunpack.c.l.b16 %v211
    %v830 = vunpack.c.h.b16 %v211
    %v831 = vunpack.c.l.b16 %v212
    %v832 = vunpack.c.h.b16 %v212
    %v833 = vunpack.c.l.b16 %v213
    %v834 = vunpack.c.h.b16 %v213
    %v835 = vunpack.c.l.b16 %v214
    %v836 = vunpack.c.h.b16 %v214
    %v837 = vunpack.c.l.b16 %v215
    %v838 = vunpack.c.h.b16 %v215
    %v839 = vunpack.c.l.b16 %v216
    %v840 = vunpack.c.h.b16 %v216
    %v841 = vunpack.c.l.b16 %v217
    %v842 = vunpack.c.h.b16 %v217
    %v843 = vunpack.c.l.b16 %v218
    %v844 = vunpack.c.h.b16 %v218
    %v845 = vunpack.c.l.b16 %v219
    %v846 = vunpack.c.h.b16 %v219
    %v847 = vunpack.c.l.b16 %v220
    %v848 = vunpack.c.h.b16 %v220
    %v849 = vunpack.c.l.b16 %v221
    %v850 = vunpack.c.h.b16 %v221
    %v851 = vunpack.c.l.b16 %v222
    %v852 = vunpack.c.h.b16 %v222
    %v853 = vunpack.c.l.b16 %v223
    %v854 = vunpack.c.h.b16 %v223
    %v855 = vunpack.c.l.b16 %v224
    %v856 = vunpack.c.h.b16 %v224
    %v857 = vunpack.c.l.b16 %v225
    %v858 = vunpack.c.h.b16 %v225
    %v859 = vunpack.c.l.b16 %v226
    %v860 = vunpack.c.h.b16 %v226
    %v861 = vunpack.c.l.b16 %v227
    %v862 = vunpack.c.h.b16 %v227
    %v863 = vunpack.c.l.b16 %v228
    %v864 = vunpack.c.h.b16 %v228
    %v865 = vunpack.c.l.b16 %v229
    %v866 = vunpack.c.h.b16 %v229
    %v867 = vunpack.c.l.b16 %v230
    %v868 = vunpack.c.h.b16 %v230
    %v869 = vunpack.c.l.b16 %v231
    %v870 = vunpack.c.h.b16 %v231
    %v871 = vunpack.c.l.b16 %v232
    %v872 = vunpack.c.h.b16 %v232
    %v873 = vunpack.c.l.b16 %v233
    %v874 = vunpack.c.h.b16 %v233
    %v875 = vunpack.c.l.b16 %v234
    %v876 = vunpack.c.h.b16 %v234
    %v877 = vunpack.c.l.b16 %v235
    %v878 = vunpack.c.h.b16 %v235
    %v879 = vunpack.c.l.b16 %v236
    %v880 = vunpack.c.h.b16 %v236
    %v881 = vunpack.c.l.b16 %v237
    %v882 = vunpack.c.h.b16 %v237
    %v883 = vunpack.c.l.b16 %v238
    %v884 = vunpack.c.h.b16 %v238
    %v885 = vunpack.c.l.b16 %v239
    %v886 = vunpack.c.h.b16 %v239
    %v887 = vunpack.c.l.b16 %v240
    %v888 = vunpack.c.h.b16 %v240
    %v889 = vunpack.c.l.b16 %v241
    %v890 = vunpack.c.h.b16 %v241
    %v891 = vunpack.c.l.b16 %v242
    %v892 = vunpack.c.h.b16 %v242
    %v893 = vunpack.c.l.b16 %v243
    %v894 = vunpack.c.h.b16 %v243
    %v895 = vunpack.c.l.b16 %v244
    %v896 = vunpack.c.h.b16 %v244
    %v897 = vunpack.c.l.b16 %v245
    %v898 = vunpack.c.h.b16 %v245
    %v899 = vunpack.c.l.b16 %v246
    %v900 = vunpack.c.h.b16 %v246
    %v901 = vunpack.c.l.b16 %v247
    %v902 = vunpack.c.h.b16 %v247
    %v903 = vunpack.c.l.b16 %v248
    %v904 = vunpack.c.h.b16 %v248
    %v905 = vunpack.c.l.b16 %v249
    %v906 = vunpack.c.h.b16 %v249
    %v907 = vunpack.c.l.b16 %v250
    %v908 = vunpack.c.h.b16 %v250
    %v909 = vunpack.c.l.b16 %v251
    %v910 = vunpack.c.h.b16 %v251
    %v911 = vunpack.c.l.b16 %v252
    %v912 = vunpack.c.h.b16 %v252
    %v913 = vunpack.c.l.b16 %v253
    %v914 = vunpack.c.h.b16 %v253
    %v915 = vunpack.c.l.b16 %v254
    %v916 = vunpack.c.h.b16 %v254
    %v917 = vunpack.c.l.b16 %v255
    %v918 = vunpack.c.h.b16 %v255
    %v919 = vunpack.c.l.b16 %v256
    %v920 = vunpack.c.h.b16 %v256
    %v921 = vunpack.c.l.b16 %v257
    %v922 = vunpack.c.h.b16 %v257
    %v923 = vunpack.c.l.b16 %v258
    %v924 = vunpack.c.h.b16 %v258
    %v925 = vunpack.c.l.b16 %v259
    %v926 = vunpack.c.h.b16 %v259
    %v927 = vunpack.c.l.b16 %v260
    %v928 = vunpack.c.h.b16 %v260
    %v929 = vunpack.c.l.b16 %v261
    %v930 = vunpack.c.h.b16 %v261
    %v931 = vunpack.c.l.b16 %v262
    %v932 = vunpack.c.h.b16 %v262
    %v933 = vunpack.c.l.b16 %v263
    %v934 = vunpack.c.h.b16 %v263
    %v935 = vunpack.c.l.b16 %v264
    %v936 = vunpack.c.h.b16 %v264
    %v937 = vunpack.c.l.b16 %v265
    %v938 = vunpack.c.h.b16 %v265
    %v939 = vunpack.c.l.b16 %v266
    %v940 = vunpack.c.h.b16 %v266
    %v941 = vunpack.c.l.b16 %v267
    %v942 = vunpack.c.h.b16 %v267
    %v943 = vunpack.c.l.b16 %v268
    %v944 = vunpack.c.h.b16 %v268
    %v945 = vunpack.c.l.b16 %v269
    %v946 = vunpack.c.h.b16 %v269
    %v947 = vunpack.c.l.b16 %v270
    %v948 = vunpack.c.h.b16 %v270
    %v949 = vunpack.c.l.b16 %v271
    %v950 = vunpack.c.h.b16 %v271
    %v951 = vunpack.c.l.b16 %v272
    %v952 = vunpack.c.h.b16 %v272
    %v953 = vunpack.c.l.b16 %v273
    %v954 = vunpack.c.h.b16 %v273
    %v955 = vunpack.c.l.b16 %v274
    %v956 = vunpack.c.h.b16 %v274
    %v957 = vunpack.c.l.b16 %v275
    %v958 = vunpack.c.h.b16 %v275
    %v959 = vunpack.c.l.b16 %v276
    %v960 = vunpack.c.h.b16 %v276
    %v961 = vunpack.c.l.b16 %v277
    %v962 = vunpack.c.h.b16 %v277
    %v963 = vunpack.c.l.b16 %v278
    %v964 = vunpack.c.h.b16 %v278
    %v965 = vpack.c.b16 %v569, %v557
    %v966 = vpack.c.b16 %v570, %v558
    %v967 = vpack.c.b16 %v571, %v559
    %v968 = vpack.c.b16 %v572, %v560
    %v969 = vpack.c.b16 %v573, %v561
    %v970 = vpack.c.b16 %v574, %v562
    %v971 = vpack.c.b16 %v575, %v563
    %v972 = vpack.c.b16 %v576, %v564
    %v973 = vpack.c.b16 %v577, %v565
    %v974 = vpack.c.b16 %v578, %v566
    %v975 = vpack.c.b16 %v579, %v567
    %v976 = vpack.c.b16 %v580, %v568
    %v977 = vpack.c.b16 %v593, %v581
    %v978 = vpack.c.b16 %v594, %v582
    %v979 = vpack.c.b16 %v595, %v583
    %v980 = vpack.c.b16 %v596, %v584
    %v981 = vpack.c.b16 %v597, %v585
    %v982 = vpack.c.b16 %v598, %v586
    %v983 = vpack.c.b16 %v599, %v587
    %v984 = vpack.c.b16 %v600, %v588
    %v985 = vpack.c.b16 %v601, %v589
    %v986 = vpack.c.b16 %v602, %v590
    %v987 = vpack.c.b16 %v603, %v591
    %v988 = vpack.c.b16 %v604, %v592
    %v989 = vpack.c.b16 %v617, %v605
    %v990 = vpack.c.b16 %v618, %v606
    %v991 = vpack.c.b16 %v619, %v607
    %v992 = vpack.c.b16 %v620, %v608
    %v993 = vpack.c.b16 %v621, %v609
    %v994 = vpack.c.b16 %v622, %v610
    %v995 = vpack.c.b16 %v623, %v611
    %v996 = vpack.c.b16 %v624, %v612
    %v997 = vpack.c.b16 %v625, %v613
    %v998 = vpack.c.b16 %v626, %v614
    %v999 = vpack.c.b16 %v627, %v615
    %v1000 = vpack.c.b16 %v628, %v616
    %v1001 = vpack.c.b16 %v641, %v629
    %v1002 = vpack.c.b16 %v642, %v630
    %v1003 = vpack.c.b16 %v643, %v631
    %v1004 = vpack.c.b16 %v644, %v632
    %v1005 = vpack.c.b16 %v645, %v633
    %v1006 = vpack.c.b16 %v646, %v634
    %v1007 = vpack.c.b16 %v647, %v635
    %v1008 = vpack.c.b16 %v648, %v636
    %v1009 = vpack.c.b16 %v649, %v637
    %v1010 = vpack.c.b16 %v650, %v638
    %v1011 = vpack.c.b16 %v651, %v639
    %v1012 = vpack.c.b16 %v652, %v640
    %v1013 = vpack.c.b16 %v665, %v653
    %v1014 = vpack.c.b16 %v666, %v654
    %v1015 = vpack.c.b16 %v667, %v655
    %v1016 = vpack.c.b16 %v668, %v656
    %v1017 = vpack.c.b16 %v669, %v657
    %v1018 = vpack.c.b16 %v670, %v658
    %v1019 = vpack.c.b16 %v671, %v659
    %v1020 = vpack.c.b16 %v672, %v660
    %v1021 = vpack.c.b16 %v673, %v661
    %v1022 = vpack.c.b16 %v674, %v662
    %v1023 = vpack.c.b16 %v675, %v663
    %v1024 = vpack.c.b16 %v676, %v664
    %v1025 = vpack.c.b16 %v689, %v677
    %v1026 = vpack.c.b16 %v690, %v678
    %v1027 = vpack.c.b16 %v691, %v679
    %v1028 = vpack.c.b16 %v692, %v680
    %v1029 = vpack.c.b16 %v693, %v681
    %v1030 = vpack.c.b16 %v694, %v682
    %v1031 = vpack.c.b16 %v695, %v683
    %v1032 = vpack.c.b16 %v696, %v684
    %v1033 = vpack.c.b16 %v697, %v685
    %v1034 = vpack.c.b16 %v698, %v686
    %v1035 = vpack.c.b16 %v699, %v687
    %v1036 = vpack.c.b16 %v700, %v688
    %v1037 = vpack.c.b16 %v713, %v701
    %v1038 = vpack.c.b16 %v714, %v702
    %v1039 = vpack.c.b16 %v715, %v703
    %v1040 = vpack.c.b16 %v716, %v704
    %v1041 = vpack.c.b16 %v717, %v705
    %v1042 = vpack.c.b16 %v718, %v706
    %v1043 = vpack.c.b16 %v719, %v707
    %v1044 = vpack.c.b16 %v720, %v708
    %v1045 = vpack.c.b16 %v721, %v709
    %v1046 = vpack.c.b16 %v722, %v710
    %v1047 = vpack.c.b16 %v723, %v711
    %v1048 = vpack.c.b16 %v724, %v712
    %v1049 = vpack.c.b16 %v737, %v725
    %v1050 = vpack.c.b16 %v738, %v726
    %v1051 = vpack.c.b16 %v739, %v727
    %v1052 = vpack.c.b16 %v740, %v728
    %v1053 = vpack.c.b16 %v741, %v729
    %v1054 = vpack.c.b16 %v742, %v730
    %v1055 = vpack.c.b16 %v743, %v731
    %v1056 = vpack.c.b16 %v744, %v732
    %v1057 = vpack.c.b16 %v745, %v733
    %v1058 = vpack.c.b16 %v746, %v734
    %v1059 = vpack.c.b16 %v747, %v735
    %v1060 = vpack.c.b16 %v748, %v736
    %v1061 = vpack.c.b16 %v761, %v749
    %v1062 = vpack.c.b16 %v762, %v750
    %v1063 = vpack.c.b16 %v763, %v751
    %v1064 = vpack.c.b16 %v764, %v752
    %v1065 = vpack.c.b16 %v765, %v753
    %v1066 = vpack.c.b16 %v766, %v754
    %v1067 = vpack.c.b16 %v767, %v755
    %v1068 = vpack.c.b16 %v768, %v756
    %v1069 = vpack.c.b16 %v769, %v757
    %v1070 = vpack.c.b16 %v770, %v758
    %v1071 = vpack.c.b16 %v771, %v759
    %v1072 = vpack.c.b16 %v772, %v760
    %v1073 = vpack.c.b16 %v785, %v773
    %v1074 = vpack.c.b16 %v786, %v774
    %v1075 = vpack.c.b16 %v787, %v775
    %v1076 = vpack.c.b16 %v788, %v776
    %v1077 = vpack.c.b16 %v789, %v777
    %v1078 = vpack.c.b16 %v790, %v778
    %v1079 = vpack.c.b16 %v791, %v779
    %v1080 = vpack.c.b16 %v792, %v780
    %v1081 = vpack.c.b16 %v793, %v781
    %v1082 = vpack.c.b16 %v794, %v782
    %v1083 = vpack.c.b16 %v795, %v783
    %v1084 = vpack.c.b16 %v796, %v784
    %v1085 = vpack.c.b16 %v809, %v797
    %v1086 = vpack.c.b16 %v810, %v798
    %v1087 = vpack.c.b16 %v811, %v799
    %v1088 = vpack.c.b16 %v812, %v800
    %v1089 = vpack.c.b16 %v813, %v801
    %v1090 = vpack.c.b16 %v814, %v802
    %v1091 = vpack.c.b16 %v815, %v803
    %v1092 = vpack.c.b16 %v816, %v804
    %v1093 = vpack.c.b16 %v817, %v805
    %v1094 = vpack.c.b16 %v818, %v806
    %v1095 = vpack.c.b16 %v819, %v807
    %v1096 = vpack.c.b16 %v820, %v808
    %v1097 = vpack.c.b16 %v833, %v821
    %v1098 = vpack.c.b16 %v834, %v822
    %v1099 = vpack.c.b16 %v835, %v823
    %v1100 = vpack.c.b16 %v836, %v824
    %v1101 = vpack.c.b16 %v837, %v825
    %v1102 = vpack.c.b16 %v838, %v826
    %v1103 = vpack.c.b16 %v839, %v827
    %v1104 = vpack.c.b16 %v840, %v828
    %v1105 = vpack.c.b16 %v841, %v829
    %v1106 = vpack.c.b16 %v842, %v830
    %v1107 = vpack.c.b16 %v843, %v831
    %v1108 = vpack.c.b16 %v844, %v832
    %v1109 = vpack.c.b16 %v857, %v845
    %v1110 = vpack.c.b16 %v858, %v846
    %v1111 = vpack.c.b16 %v859, %v847
    %v1112 = vpack.c.b16 %v860, %v848
    %v1113 = vpack.c.b16 %v861, %v849
    %v1114 = vpack.c.b16 %v862, %v850
    %v1115 = vpack.c.b16 %v863, %v851
    %v1116 = vpack.c.b16 %v864, %v852
    %v1117 = vpack.c.b16 %v865, %v853
    %v1118 = vpack.c.b16 %v866, %v854
    %v1119 = vpack.c.b16 %v867, %v855
    %v1120 = vpack.c.b16 %v868, %v856
    %v1121 = vpack.c.b16 %v881, %v869
    %v1122 = vpack.c.b16 %v882, %v870
    %v1123 = vpack.c.b16 %v883, %v871
    %v1124 = vpack.c.b16 %v884, %v872
    %v1125 = vpack.c.b16 %v885, %v873
    %v1126 = vpack.c.b16 %v886, %v874
    %v1127 = vpack.c.b16 %v887, %v875
    %v1128 = vpack.c.b16 %v888, %v876
    %v1129 = vpack.c.b16 %v889, %v877
    %v1130 = vpack.c.b16 %v890, %v878
    %v1131 = vpack.c.b16 %v891, %v879
    %v1132 = vpack.c.b16 %v892, %v880
    %v1133 = vpack.c.b16 %v905, %v893
    %v1134 = vpack.c.b16 %v906, %v894
    %v1135 = vpack.c.b16 %v907, %v895
    %v1136 = vpack.c.b16 %v908, %v896
    %v1137 = vpack.c.b16 %v909, %v897
    %v1138 = vpack.c.b16 %v910, %v898
    %v1139 = vpack.c.b16 %v911, %v899
    %v1140 = vpack.c.b16 %v912, %v900
    %v1141 = vpack.c.b16 %v913, %v901
    %v1142 = vpack.c.b16 %v914, %v902
    %v1143 = vpack.c.b16 %v915, %v903
    %v1144 = vpack.c.b16 %v916, %v904
    %v1145 = vpack.c.b16 %v929, %v917
    %v1146 = vpack.c.b16 %v930, %v918
    %v1147 = vpack.c.b16 %v931, %v919
    %v1148 = vpack.c.b16 %v932, %v920
    %v1149 = vpack.c.b16 %v933, %v921
    %v1150 = vpack.c.b16 %v934, %v922
    %v1151 = vpack.c.b16 %v935, %v923
    %v1152 = vpack.c.b16 %v936, %v924
    %v1153 = vpack.c.b16 %v937, %v925
    %v1154 = vpack.c.b16 %v938, %v926
    %v1155 = vpack.c.b16 %v939, %v927
    %v1156 = vpack.c.b16 %v940, %v928
    %v1157 = vpack.c.b16 %v953, %v941
    %v1158 = vpack.c.b16 %v954, %v942
    %v1159 = vpack.c.b16 %v955, %v943
    %v1160 = vpack.c.b16 %v956, %v944
    %v1161 = vpack.c.b16 %v957, %v945
    %v1162 = vpack.c.b16 %v958, %v946
    %v1163 = vpack.c.b16 %v959, %v947
    %v1164 = vpack.c.b16 %v960, %v948
    %v1165 = vpack.c.b16 %v961, %v949
    %v1166 = vpack.c.b16 %v962, %v950
    %v1167 = vpack.c.b16 %v963, %v951
    %v1168 = vpack.c.b16 %v964, %v952
    %vm1373 = vcmask 130048
    %v1375 = vsel %vm1373, %v350, 0
    %1377 = vmatprep.subr.bf16.mxu0 %v966
    %1378 = vmatpush1.bf16.msra.mxu0 %v965
    %1379 = vmatprep.subr.bf16.mxu0 %v978
    %1380 = vmatpush1.bf16.msra.mxu0 %v977
    %1381 = vmatprep.subr.bf16.mxu0 %v990
    %1382 = vmatpush1.bf16.msra.mxu0 %v989
    %1383 = vmatprep.subr.bf16.mxu0 %v1002
    %1384 = vmatpush1.bf16.msra.mxu0 %v1001
    %1385 = vmatprep.subr.bf16.mxu0 %v1014
    %1386 = vmatpush1.bf16.msra.mxu0 %v1013
    %1387 = vmatprep.subr.bf16.mxu0 %v1026
    %1388 = vmatpush1.bf16.msra.mxu0 %v1025
    %1389 = vmatprep.subr.bf16.mxu0 %v1038
    %1390 = vmatpush1.bf16.msra.mxu0 %v1037
    %1391 = vmatprep.subr.bf16.mxu0 %v1050
    %1392 = vmatpush1.bf16.msra.mxu0 %v1049
    %1393 = vmatprep.subr.bf16.mxu0 %v1062
    %1394 = vmatpush1.bf16.msra.mxu0 %v1061
    %1395 = vmatprep.subr.bf16.mxu0 %v1074
    %1396 = vmatpush1.bf16.msra.mxu0 %v1073
    %1397 = vmatprep.subr.bf16.mxu0 %v1086
    %1398 = vmatpush1.bf16.msra.mxu0 %v1085
    %1399 = vmatprep.subr.bf16.mxu0 %v1098
    %1400 = vmatpush1.bf16.msra.mxu0 %v1097
    %1401 = vmatprep.subr.bf16.mxu0 %v1110
    %1402 = vmatpush1.bf16.msra.mxu0 %v1109
    %1403 = vmatprep.subr.bf16.mxu0 %v1122
    %1404 = vmatpush1.bf16.msra.mxu0 %v1121
    %1405 = vmatprep.subr.bf16.mxu0 %v1134
    %1406 = vmatpush1.bf16.msra.mxu0 %v1133
    %1407 = vmatprep.subr.bf16.mxu0 %v1146
    %1408 = vmatpush1.bf16.msra.mxu0 %v1145
    %1409 = vmatprep.mubr.bf16.mxu0 %v349
    %1410 = vmatmul.mubr.bf16.gmra.mrb[0].mxu0 %v348
    %v1411 = vpop.f32.mrb[0].mxu0
    %v1412 = vadd.f32 %v286, %v1411
    %v1413 = vpop.f32.mrb[0].mxu0
    %v1414 = vadd.f32 %v290, %v1413
    %v1415 = vpop.f32.mrb[0].mxu0
    %v1416 = vpop.f32.mrb[0].mxu0
    %1417 = vdwg.mxu0
    %1418 = vmatprep.subr.bf16.mxu0 %v1158
    %1419 = vmatpush1.bf16.msra.mxu0 %v1157
    %1420 = vmatprep.subr.bf16.mxu0 0
    %1421 = vmatpush1.bf16.msra.mxu0 0
    %1422 = vmatprep.subr.bf16.mxu0 0
    %1423 = vmatpush1.bf16.msra.mxu0 0
    %1424 = vmatprep.subr.bf16.mxu0 0
    %1425 = vmatpush1.bf16.msra.mxu0 0
    %1426 = vmatprep.subr.bf16.mxu0 0
    %1427 = vmatpush1.bf16.msra.mxu0 0
    %1428 = vmatprep.subr.bf16.mxu0 0
    %1429 = vmatpush1.bf16.msra.mxu0 0
    %1430 = vmatprep.subr.bf16.mxu0 0
    %1431 = vmatpush1.bf16.msra.mxu0 0
    %1432 = vmatprep.subr.bf16.mxu0 0
    %1433 = vmatpush1.bf16.msra.mxu0 0
    %1434 = vmatprep.subr.bf16.mxu0 0
    %1435 = vmatpush1.bf16.msra.mxu0 0
    %1436 = vmatprep.subr.bf16.mxu0 0
    %1437 = vmatpush1.bf16.msra.mxu0 0
    %1438 = vmatprep.subr.bf16.mxu0 0
    %1439 = vmatpush1.bf16.msra.mxu0 0
    %1440 = vmatprep.subr.bf16.mxu0 0
    %1441 = vmatpush1.bf16.msra.mxu0 0
    %1442 = vmatprep.subr.bf16.mxu0 0
    %1443 = vmatpush1.bf16.msra.mxu0 0
    %1444 = vmatprep.subr.bf16.mxu0 0
    %1445 = vmatpush1.bf16.msra.mxu0 0
    %1446 = vmatprep.subr.bf16.mxu0 0
    %1447 = vmatpush1.bf16.msra.mxu0 0
    %1448 = vmatprep.subr.bf16.mxu0 0
    %1449 = vmatpush1.bf16.msra.mxu0 0
    %1450 = vmatprep.mubr.bf16.mxu0 0
    %1451 = vmatmul.mubr.bf16.gmra.mrb[0].mxu0 %v1375
    %v1452 = vpop.f32.mrb[0].mxu0
    %v1453 = vadd.f32 %v1412, %v1452
    %v1454 = vpop.f32.mrb[0].mxu0
    %v1455 = vadd.f32 %v1414, %v1454
    %v1456 = vpop.f32.mrb[0].mxu0
    %v1457 = vpop.f32.mrb[0].mxu0
    %1458 = vdwg.mxu0
    %1459 = vmatprep.subr.bf16.mxu0 %v968
    %1460 = vmatpush1.bf16.msra.mxu0 %v967
    %1461 = vmatprep.subr.bf16.mxu0 %v980
    %1462 = vmatpush1.bf16.msra.mxu0 %v979
    %1463 = vmatprep.subr.bf16.mxu0 %v992
    %1464 = vmatpush1.bf16.msra.mxu0 %v991
    %1465 = vmatprep.subr.bf16.mxu0 %v1004
    %1466 = vmatpush1.bf16.msra.mxu0 %v1003
    %1467 = vmatprep.subr.bf16.mxu0 %v1016
    %1468 = vmatpush1.bf16.msra.mxu0 %v1015
    %1469 = vmatprep.subr.bf16.mxu0 %v1028
    %1470 = vmatpush1.bf16.msra.mxu0 %v1027
    %1471 = vmatprep.subr.bf16.mxu0 %v1040
    %1472 = vmatpush1.bf16.msra.mxu0 %v1039
    %1473 = vmatprep.subr.bf16.mxu0 %v1052
    %1474 = vmatpush1.bf16.msra.mxu0 %v1051
    %1475 = vmatprep.subr.bf16.mxu0 %v1064
    %1476 = vmatpush1.bf16.msra.mxu0 %v1063
    %1477 = vmatprep.subr.bf16.mxu0 %v1076
    %1478 = vmatpush1.bf16.msra.mxu0 %v1075
    %1479 = vmatprep.subr.bf16.mxu0 %v1088
    %1480 = vmatpush1.bf16.msra.mxu0 %v1087
    %1481 = vmatprep.subr.bf16.mxu0 %v1100
    %1482 = vmatpush1.bf16.msra.mxu0 %v1099
    %1483 = vmatprep.subr.bf16.mxu0 %v1112
    %1484 = vmatpush1.bf16.msra.mxu0 %v1111
    %1485 = vmatprep.subr.bf16.mxu0 %v1124
    %1486 = vmatpush1.bf16.msra.mxu0 %v1123
    %1487 = vmatprep.subr.bf16.mxu0 %v1136
    %1488 = vmatpush1.bf16.msra.mxu0 %v1135
    %1489 = vmatprep.subr.bf16.mxu0 %v1148
    %1490 = vmatpush1.bf16.msra.mxu0 %v1147
    %1491 = vmatprep.mubr.bf16.mxu0 %v349
    %1492 = vmatmul.mubr.bf16.gmra.mrb[0].mxu0 %v348
    %v1493 = vpop.f32.mrb[0].mxu0
    %v1494 = vadd.f32 %v294, %v1493
    %v1495 = vpop.f32.mrb[0].mxu0
    %v1496 = vadd.f32 %v298, %v1495
    %v1497 = vpop.f32.mrb[0].mxu0
    %v1498 = vpop.f32.mrb[0].mxu0
    %1499 = vdwg.mxu0
    %1500 = vmatprep.subr.bf16.mxu0 %v1160
    %1501 = vmatpush1.bf16.msra.mxu0 %v1159
    %1502 = vmatprep.subr.bf16.mxu0 0
    %1503 = vmatpush1.bf16.msra.mxu0 0
    %1504 = vmatprep.subr.bf16.mxu0 0
    %1505 = vmatpush1.bf16.msra.mxu0 0
    %1506 = vmatprep.subr.bf16.mxu0 0
    %1507 = vmatpush1.bf16.msra.mxu0 0
    %1508 = vmatprep.subr.bf16.mxu0 0
    %1509 = vmatpush1.bf16.msra.mxu0 0
    %1510 = vmatprep.subr.bf16.mxu0 0
    %1511 = vmatpush1.bf16.msra.mxu0 0
    %1512 = vmatprep.subr.bf16.mxu0 0
    %1513 = vmatpush1.bf16.msra.mxu0 0
    %1514 = vmatprep.subr.bf16.mxu0 0
    %1515 = vmatpush1.bf16.msra.mxu0 0
    %1516 = vmatprep.subr.bf16.mxu0 0
    %1517 = vmatpush1.bf16.msra.mxu0 0
    %1518 = vmatprep.subr.bf16.mxu0 0
    %1519 = vmatpush1.bf16.msra.mxu0 0
    %1520 = vmatprep.subr.bf16.mxu0 0
    %1521 = vmatpush1.bf16.msra.mxu0 0
    %1522 = vmatprep.subr.bf16.mxu0 0
    %1523 = vmatpush1.bf16.msra.mxu0 0
    %1524 = vmatprep.subr.bf16.mxu0 0
    %1525 = vmatpush1.bf16.msra.mxu0 0
    %1526 = vmatprep.subr.bf16.mxu0 0
    %1527 = vmatpush1.bf16.msra.mxu0 0
    %1528 = vmatprep.subr.bf16.mxu0 0
    %1529 = vmatpush1.bf16.msra.mxu0 0
    %1530 = vmatprep.subr.bf16.mxu0 0
    %1531 = vmatpush1.bf16.msra.mxu0 0
    %1532 = vmatprep.mubr.bf16.mxu0 0
    %1533 = vmatmul.mubr.bf16.gmra.mrb[0].mxu0 %v1375
    %v1534 = vpop.f32.mrb[0].mxu0
    %v1535 = vadd.f32 %v1494, %v1534
    %v1536 = vpop.f32.mrb[0].mxu0
    %v1537 = vadd.f32 %v1496, %v1536
    %v1538 = vpop.f32.mrb[0].mxu0
    %v1539 = vpop.f32.mrb[0].mxu0
    %1540 = vdwg.mxu0
    %1541 = vmatprep.subr.bf16.mxu0 %v970
    %1542 = vmatpush1.bf16.msra.mxu0 %v969
    %1543 = vmatprep.subr.bf16.mxu0 %v982
    %1544 = vmatpush1.bf16.msra.mxu0 %v981
    %1545 = vmatprep.subr.bf16.mxu0 %v994
    %1546 = vmatpush1.bf16.msra.mxu0 %v993
    %1547 = vmatprep.subr.bf16.mxu0 %v1006
    %1548 = vmatpush1.bf16.msra.mxu0 %v1005
    %1549 = vmatprep.subr.bf16.mxu0 %v1018
    %1550 = vmatpush1.bf16.msra.mxu0 %v1017
    %1551 = vmatprep.subr.bf16.mxu0 %v1030
    %1552 = vmatpush1.bf16.msra.mxu0 %v1029
    %1553 = vmatprep.subr.bf16.mxu0 %v1042
    %1554 = vmatpush1.bf16.msra.mxu0 %v1041
    %1555 = vmatprep.subr.bf16.mxu0 %v1054
    %1556 = vmatpush1.bf16.msra.mxu0 %v1053
    %1557 = vmatprep.subr.bf16.mxu0 %v1066
    %1558 = vmatpush1.bf16.msra.mxu0 %v1065
    %1559 = vmatprep.subr.bf16.mxu0 %v1078
    %1560 = vmatpush1.bf16.msra.mxu0 %v1077
    %1561 = vmatprep.subr.bf16.mxu0 %v1090
    %1562 = vmatpush1.bf16.msra.mxu0 %v1089
    %1563 = vmatprep.subr.bf16.mxu0 %v1102
    %1564 = vmatpush1.bf16.msra.mxu0 %v1101
    %1565 = vmatprep.subr.bf16.mxu0 %v1114
    %1566 = vmatpush1.bf16.msra.mxu0 %v1113
    %1567 = vmatprep.subr.bf16.mxu0 %v1126
    %1568 = vmatpush1.bf16.msra.mxu0 %v1125
    %1569 = vmatprep.subr.bf16.mxu0 %v1138
    %1570 = vmatpush1.bf16.msra.mxu0 %v1137
    %1571 = vmatprep.subr.bf16.mxu0 %v1150
    %1572 = vmatpush1.bf16.msra.mxu0 %v1149
    %1573 = vmatprep.mubr.bf16.mxu0 %v349
    %1574 = vmatmul.mubr.bf16.gmra.mrb[0].mxu0 %v348
    %v1575 = vpop.f32.mrb[0].mxu0
    %v1576 = vadd.f32 %v302, %v1575
    %v1577 = vpop.f32.mrb[0].mxu0
    %v1578 = vadd.f32 %v306, %v1577
    %v1579 = vpop.f32.mrb[0].mxu0
    %v1580 = vpop.f32.mrb[0].mxu0
    %1581 = vdwg.mxu0
    %1582 = vmatprep.subr.bf16.mxu0 %v1162
    %1583 = vmatpush1.bf16.msra.mxu0 %v1161
    %1584 = vmatprep.subr.bf16.mxu0 0
    %1585 = vmatpush1.bf16.msra.mxu0 0
    %1586 = vmatprep.subr.bf16.mxu0 0
    %1587 = vmatpush1.bf16.msra.mxu0 0
    %1588 = vmatprep.subr.bf16.mxu0 0
    %1589 = vmatpush1.bf16.msra.mxu0 0
    %1590 = vmatprep.subr.bf16.mxu0 0
    %1591 = vmatpush1.bf16.msra.mxu0 0
    %1592 = vmatprep.subr.bf16.mxu0 0
    %1593 = vmatpush1.bf16.msra.mxu0 0
    %1594 = vmatprep.subr.bf16.mxu0 0
    %1595 = vmatpush1.bf16.msra.mxu0 0
    %1596 = vmatprep.subr.bf16.mxu0 0
    %1597 = vmatpush1.bf16.msra.mxu0 0
    %1598 = vmatprep.subr.bf16.mxu0 0
    %1599 = vmatpush1.bf16.msra.mxu0 0
    %1600 = vmatprep.subr.bf16.mxu0 0
    %1601 = vmatpush1.bf16.msra.mxu0 0
    %1602 = vmatprep.subr.bf16.mxu0 0
    %1603 = vmatpush1.bf16.msra.mxu0 0
    %1604 = vmatprep.subr.bf16.mxu0 0
    %1605 = vmatpush1.bf16.msra.mxu0 0
    %1606 = vmatprep.subr.bf16.mxu0 0
    %1607 = vmatpush1.bf16.msra.mxu0 0
    %1608 = vmatprep.subr.bf16.mxu0 0
    %1609 = vmatpush1.bf16.msra.mxu0 0
    %1610 = vmatprep.subr.bf16.mxu0 0
    %1611 = vmatpush1.bf16.msra.mxu0 0
    %1612 = vmatprep.subr.bf16.mxu0 0
    %1613 = vmatpush1.bf16.msra.mxu0 0
    %1614 = vmatprep.mubr.bf16.mxu0 0
    %1615 = vmatmul.mubr.bf16.gmra.mrb[0].mxu0 %v1375
    %v1616 = vpop.f32.mrb[0].mxu0
    %v1617 = vadd.f32 %v1576, %v1616
    %v1618 = vpop.f32.mrb[0].mxu0
    %v1619 = vadd.f32 %v1578, %v1618
    %v1620 = vpop.f32.mrb[0].mxu0
    %v1621 = vpop.f32.mrb[0].mxu0
    %1622 = vdwg.mxu0
    %1623 = vmatprep.subr.bf16.mxu0 %v972
    %1624 = vmatpush1.bf16.msra.mxu0 %v971
    %1625 = vmatprep.subr.bf16.mxu0 %v984
    %1626 = vmatpush1.bf16.msra.mxu0 %v983
    %1627 = vmatprep.subr.bf16.mxu0 %v996
    %1628 = vmatpush1.bf16.msra.mxu0 %v995
    %1629 = vmatprep.subr.bf16.mxu0 %v1008
    %1630 = vmatpush1.bf16.msra.mxu0 %v1007
    %1631 = vmatprep.subr.bf16.mxu0 %v1020
    %1632 = vmatpush1.bf16.msra.mxu0 %v1019
    %1633 = vmatprep.subr.bf16.mxu0 %v1032
    %1634 = vmatpush1.bf16.msra.mxu0 %v1031
    %1635 = vmatprep.subr.bf16.mxu0 %v1044
    %1636 = vmatpush1.bf16.msra.mxu0 %v1043
    %1637 = vmatprep.subr.bf16.mxu0 %v1056
    %1638 = vmatpush1.bf16.msra.mxu0 %v1055
    %1639 = vmatprep.subr.bf16.mxu0 %v1068
    %1640 = vmatpush1.bf16.msra.mxu0 %v1067
    %1641 = vmatprep.subr.bf16.mxu0 %v1080
    %1642 = vmatpush1.bf16.msra.mxu0 %v1079
    %1643 = vmatprep.subr.bf16.mxu0 %v1092
    %1644 = vmatpush1.bf16.msra.mxu0 %v1091
    %1645 = vmatprep.subr.bf16.mxu0 %v1104
    %1646 = vmatpush1.bf16.msra.mxu0 %v1103
    %1647 = vmatprep.subr.bf16.mxu0 %v1116
    %1648 = vmatpush1.bf16.msra.mxu0 %v1115
    %1649 = vmatprep.subr.bf16.mxu0 %v1128
    %1650 = vmatpush1.bf16.msra.mxu0 %v1127
    %1651 = vmatprep.subr.bf16.mxu0 %v1140
    %1652 = vmatpush1.bf16.msra.mxu0 %v1139
    %1653 = vmatprep.subr.bf16.mxu0 %v1152
    %1654 = vmatpush1.bf16.msra.mxu0 %v1151
    %1655 = vmatprep.mubr.bf16.mxu0 %v349
    %1656 = vmatmul.mubr.bf16.gmra.mrb[0].mxu0 %v348
    %v1657 = vpop.f32.mrb[0].mxu0
    %v1658 = vadd.f32 %v310, %v1657
    %v1659 = vpop.f32.mrb[0].mxu0
    %v1660 = vadd.f32 %v314, %v1659
    %v1661 = vpop.f32.mrb[0].mxu0
    %v1662 = vpop.f32.mrb[0].mxu0
    %1663 = vdwg.mxu0
    %1664 = vmatprep.subr.bf16.mxu0 %v1164
    %1665 = vmatpush1.bf16.msra.mxu0 %v1163
    %1666 = vmatprep.subr.bf16.mxu0 0
    %1667 = vmatpush1.bf16.msra.mxu0 0
    %1668 = vmatprep.subr.bf16.mxu0 0
    %1669 = vmatpush1.bf16.msra.mxu0 0
    %1670 = vmatprep.subr.bf16.mxu0 0
    %1671 = vmatpush1.bf16.msra.mxu0 0
    %1672 = vmatprep.subr.bf16.mxu0 0
    %1673 = vmatpush1.bf16.msra.mxu0 0
    %1674 = vmatprep.subr.bf16.mxu0 0
    %1675 = vmatpush1.bf16.msra.mxu0 0
    %1676 = vmatprep.subr.bf16.mxu0 0
    %1677 = vmatpush1.bf16.msra.mxu0 0
    %1678 = vmatprep.subr.bf16.mxu0 0
    %1679 = vmatpush1.bf16.msra.mxu0 0
    %1680 = vmatprep.subr.bf16.mxu0 0
    %1681 = vmatpush1.bf16.msra.mxu0 0
    %1682 = vmatprep.subr.bf16.mxu0 0
    %1683 = vmatpush1.bf16.msra.mxu0 0
    %1684 = vmatprep.subr.bf16.mxu0 0
    %1685 = vmatpush1.bf16.msra.mxu0 0
    %1686 = vmatprep.subr.bf16.mxu0 0
    %1687 = vmatpush1.bf16.msra.mxu0 0
    %1688 = vmatprep.subr.bf16.mxu0 0
    %1689 = vmatpush1.bf16.msra.mxu0 0
    %1690 = vmatprep.subr.bf16.mxu0 0
    %1691 = vmatpush1.bf16.msra.mxu0 0
    %1692 = vmatprep.subr.bf16.mxu0 0
    %1693 = vmatpush1.bf16.msra.mxu0 0
    %1694 = vmatprep.subr.bf16.mxu0 0
    %1695 = vmatpush1.bf16.msra.mxu0 0
    %1696 = vmatprep.mubr.bf16.mxu0 0
    %1697 = vmatmul.mubr.bf16.gmra.mrb[0].mxu0 %v1375
    %v1698 = vpop.f32.mrb[0].mxu0
    %v1699 = vadd.f32 %v1658, %v1698
    %v1700 = vpop.f32.mrb[0].mxu0
    %v1701 = vadd.f32 %v1660, %v1700
    %v1702 = vpop.f32.mrb[0].mxu0
    %v1703 = vpop.f32.mrb[0].mxu0
    %1704 = vdwg.mxu0
    %1705 = vmatprep.subr.bf16.mxu0 %v974
    %1706 = vmatpush1.bf16.msra.mxu0 %v973
    %1707 = vmatprep.subr.bf16.mxu0 %v986
    %1708 = vmatpush1.bf16.msra.mxu0 %v985
    %1709 = vmatprep.subr.bf16.mxu0 %v998
    %1710 = vmatpush1.bf16.msra.mxu0 %v997
    %1711 = vmatprep.subr.bf16.mxu0 %v1010
    %1712 = vmatpush1.bf16.msra.mxu0 %v1009
    %1713 = vmatprep.subr.bf16.mxu0 %v1022
    %1714 = vmatpush1.bf16.msra.mxu0 %v1021
    %1715 = vmatprep.subr.bf16.mxu0 %v1034
    %1716 = vmatpush1.bf16.msra.mxu0 %v1033
    %1717 = vmatprep.subr.bf16.mxu0 %v1046
    %1718 = vmatpush1.bf16.msra.mxu0 %v1045
    %1719 = vmatprep.subr.bf16.mxu0 %v1058
    %1720 = vmatpush1.bf16.msra.mxu0 %v1057
    %1721 = vmatprep.subr.bf16.mxu0 %v1070
    %1722 = vmatpush1.bf16.msra.mxu0 %v1069
    %1723 = vmatprep.subr.bf16.mxu0 %v1082
    %1724 = vmatpush1.bf16.msra.mxu0 %v1081
    %1725 = vmatprep.subr.bf16.mxu0 %v1094
    %1726 = vmatpush1.bf16.msra.mxu0 %v1093
    %1727 = vmatprep.subr.bf16.mxu0 %v1106
    %1728 = vmatpush1.bf16.msra.mxu0 %v1105
    %1729 = vmatprep.subr.bf16.mxu0 %v1118
    %1730 = vmatpush1.bf16.msra.mxu0 %v1117
    %1731 = vmatprep.subr.bf16.mxu0 %v1130
    %1732 = vmatpush1.bf16.msra.mxu0 %v1129
    %1733 = vmatprep.subr.bf16.mxu0 %v1142
    %1734 = vmatpush1.bf16.msra.mxu0 %v1141
    %1735 = vmatprep.subr.bf16.mxu0 %v1154
    %1736 = vmatpush1.bf16.msra.mxu0 %v1153
    %1737 = vmatprep.mubr.bf16.mxu0 %v349
    %1738 = vmatmul.mubr.bf16.gmra.mrb[0].mxu0 %v348
    %v1739 = vpop.f32.mrb[0].mxu0
    %v1740 = vadd.f32 %v318, %v1739
    %v1741 = vpop.f32.mrb[0].mxu0
    %v1742 = vadd.f32 %v322, %v1741
    %v1743 = vpop.f32.mrb[0].mxu0
    %v1744 = vpop.f32.mrb[0].mxu0
    %1745 = vdwg.mxu0
    %1746 = vmatprep.subr.bf16.mxu0 %v1166
    %1747 = vmatpush1.bf16.msra.mxu0 %v1165
    %1748 = vmatprep.subr.bf16.mxu0 0
    %1749 = vmatpush1.bf16.msra.mxu0 0
    %1750 = vmatprep.subr.bf16.mxu0 0
    %1751 = vmatpush1.bf16.msra.mxu0 0
    %1752 = vmatprep.subr.bf16.mxu0 0
    %1753 = vmatpush1.bf16.msra.mxu0 0
    %1754 = vmatprep.subr.bf16.mxu0 0
    %1755 = vmatpush1.bf16.msra.mxu0 0
    %1756 = vmatprep.subr.bf16.mxu0 0
    %1757 = vmatpush1.bf16.msra.mxu0 0
    %1758 = vmatprep.subr.bf16.mxu0 0
    %1759 = vmatpush1.bf16.msra.mxu0 0
    %1760 = vmatprep.subr.bf16.mxu0 0
    %1761 = vmatpush1.bf16.msra.mxu0 0
    %1762 = vmatprep.subr.bf16.mxu0 0
    %1763 = vmatpush1.bf16.msra.mxu0 0
    %1764 = vmatprep.subr.bf16.mxu0 0
    %1765 = vmatpush1.bf16.msra.mxu0 0
    %1766 = vmatprep.subr.bf16.mxu0 0
    %1767 = vmatpush1.bf16.msra.mxu0 0
    %1768 = vmatprep.subr.bf16.mxu0 0
    %1769 = vmatpush1.bf16.msra.mxu0 0
    %1770 = vmatprep.subr.bf16.mxu0 0
    %1771 = vmatpush1.bf16.msra.mxu0 0
    %1772 = vmatprep.subr.bf16.mxu0 0
    %1773 = vmatpush1.bf16.msra.mxu0 0
    %1774 = vmatprep.subr.bf16.mxu0 0
    %1775 = vmatpush1.bf16.msra.mxu0 0
    %1776 = vmatprep.subr.bf16.mxu0 0
    %1777 = vmatpush1.bf16.msra.mxu0 0
    %1778 = vmatprep.mubr.bf16.mxu0 0
    %1779 = vmatmul.mubr.bf16.gmra.mrb[0].mxu0 %v1375
    %v1780 = vpop.f32.mrb[0].mxu0
    %v1781 = vadd.f32 %v1740, %v1780
    %v1782 = vpop.f32.mrb[0].mxu0
    %v1783 = vadd.f32 %v1742, %v1782
    %v1784 = vpop.f32.mrb[0].mxu0
    %v1785 = vpop.f32.mrb[0].mxu0
    %1786 = vdwg.mxu0
    %1787 = vmatprep.subr.bf16.mxu0 %v976
    %1788 = vmatpush1.bf16.msra.mxu0 %v975
    %1789 = vmatprep.subr.bf16.mxu0 %v988
    %1790 = vmatpush1.bf16.msra.mxu0 %v987
    %1791 = vmatprep.subr.bf16.mxu0 %v1000
    %1792 = vmatpush1.bf16.msra.mxu0 %v999
    %1793 = vmatprep.subr.bf16.mxu0 %v1012
    %1794 = vmatpush1.bf16.msra.mxu0 %v1011
    %1795 = vmatprep.subr.bf16.mxu0 %v1024
    %1796 = vmatpush1.bf16.msra.mxu0 %v1023
    %1797 = vmatprep.subr.bf16.mxu0 %v1036
    %1798 = vmatpush1.bf16.msra.mxu0 %v1035
    %1799 = vmatprep.subr.bf16.mxu0 %v1048
    %1800 = vmatpush1.bf16.msra.mxu0 %v1047
    %1801 = vmatprep.subr.bf16.mxu0 %v1060
    %1802 = vmatpush1.bf16.msra.mxu0 %v1059
    %1803 = vmatprep.subr.bf16.mxu0 %v1072
    %1804 = vmatpush1.bf16.msra.mxu0 %v1071
    %1805 = vmatprep.subr.bf16.mxu0 %v1084
    %1806 = vmatpush1.bf16.msra.mxu0 %v1083
    %1807 = vmatprep.subr.bf16.mxu0 %v1096
    %1808 = vmatpush1.bf16.msra.mxu0 %v1095
    %1809 = vmatprep.subr.bf16.mxu0 %v1108
    %1810 = vmatpush1.bf16.msra.mxu0 %v1107
    %1811 = vmatprep.subr.bf16.mxu0 %v1120
    %1812 = vmatpush1.bf16.msra.mxu0 %v1119
    %1813 = vmatprep.subr.bf16.mxu0 %v1132
    %1814 = vmatpush1.bf16.msra.mxu0 %v1131
    %1815 = vmatprep.subr.bf16.mxu0 %v1144
    %1816 = vmatpush1.bf16.msra.mxu0 %v1143
    %1817 = vmatprep.subr.bf16.mxu0 %v1156
    %1818 = vmatpush1.bf16.msra.mxu0 %v1155
    %1819 = vmatprep.mubr.bf16.mxu0 %v349
    %1820 = vmatmul.mubr.bf16.gmra.mrb[0].mxu0 %v348
    %v1821 = vpop.f32.mrb[0].mxu0
    %v1822 = vadd.f32 %v326, %v1821
    %v1823 = vpop.f32.mrb[0].mxu0
    %v1824 = vadd.f32 %v330, %v1823
    %v1825 = vpop.f32.mrb[0].mxu0
    %v1826 = vpop.f32.mrb[0].mxu0
    %1827 = vdwg.mxu0
    %1828 = vmatprep.subr.bf16.mxu0 %v1168
    %1829 = vmatpush1.bf16.msra.mxu0 %v1167
    %1830 = vmatprep.subr.bf16.mxu0 0
    %1831 = vmatpush1.bf16.msra.mxu0 0
    %1832 = vmatprep.subr.bf16.mxu0 0
    %1833 = vmatpush1.bf16.msra.mxu0 0
    %1834 = vmatprep.subr.bf16.mxu0 0
    %1835 = vmatpush1.bf16.msra.mxu0 0
    %1836 = vmatprep.subr.bf16.mxu0 0
    %1837 = vmatpush1.bf16.msra.mxu0 0
    %1838 = vmatprep.subr.bf16.mxu0 0
    %1839 = vmatpush1.bf16.msra.mxu0 0
    %1840 = vmatprep.subr.bf16.mxu0 0
    %1841 = vmatpush1.bf16.msra.mxu0 0
    %1842 = vmatprep.subr.bf16.mxu0 0
    %1843 = vmatpush1.bf16.msra.mxu0 0
    %1844 = vmatprep.subr.bf16.mxu0 0
    %1845 = vmatpush1.bf16.msra.mxu0 0
    %1846 = vmatprep.subr.bf16.mxu0 0
    %1847 = vmatpush1.bf16.msra.mxu0 0
    %1848 = vmatprep.subr.bf16.mxu0 0
    %1849 = vmatpush1.bf16.msra.mxu0 0
    %1850 = vmatprep.subr.bf16.mxu0 0
    %1851 = vmatpush1.bf16.msra.mxu0 0
    %1852 = vmatprep.subr.bf16.mxu0 0
    %1853 = vmatpush1.bf16.msra.mxu0 0
    %1854 = vmatprep.subr.bf16.mxu0 0
    %1855 = vmatpush1.bf16.msra.mxu0 0
    %1856 = vmatprep.subr.bf16.mxu0 0
    %1857 = vmatpush1.bf16.msra.mxu0 0
    %1858 = vmatprep.subr.bf16.mxu0 0
    %1859 = vmatpush1.bf16.msra.mxu0 0
    %1860 = vmatprep.mubr.bf16.mxu0 0
    %1861 = vmatmul.mubr.bf16.gmra.mrb[0].mxu0 %v1375
    %v1862 = vpop.f32.mrb[0].mxu0
    %v1863 = vadd.f32 %v1822, %v1862
    %v1864 = vpop.f32.mrb[0].mxu0
    %v1865 = vadd.f32 %v1824, %v1864
    %v1866 = vpop.f32.mrb[0].mxu0
    %v1867 = vpop.f32.mrb[0].mxu0
    %1868 = vdwg.mxu0
    %v1869 = vsub.f32 0.0, %v1453
    %v1870 = vsub.f32 0.0, %v1455
    %v1871 = vsub.f32 0.0, %v1535
    %v1872 = vsub.f32 0.0, %v1537
    %v1873 = vsub.f32 0.0, %v1617
    %v1874 = vsub.f32 0.0, %v1619
    %v1875 = vsub.f32 0.0, %v1699
    %v1876 = vsub.f32 0.0, %v1701
    %v1877 = vsub.f32 0.0, %v1781
    %v1878 = vsub.f32 0.0, %v1783
    %v1879 = vsub.f32 0.0, %v1863
    %v1880 = vsub.f32 0.0, %v1865
    %v1881 = vmul.f32 %v1869, 1.442695
    %v1882 = vpow.pop %v1881
    %v1883 = vmul.f32 %v1870, 1.442695
    %v1884 = vpow.pop %v1883
    %v1885 = vmul.f32 %v1871, 1.442695
    %v1886 = vpow.pop %v1885
    %v1887 = vmul.f32 %v1872, 1.442695
    %v1888 = vpow.pop %v1887
    %v1889 = vmul.f32 %v1873, 1.442695
    %v1890 = vpow.pop %v1889
    %v1891 = vmul.f32 %v1874, 1.442695
    %v1892 = vpow.pop %v1891
    %v1893 = vmul.f32 %v1875, 1.442695
    %v1894 = vpow.pop %v1893
    %v1895 = vmul.f32 %v1876, 1.442695
    %v1896 = vpow.pop %v1895
    %v1897 = vmul.f32 %v1877, 1.442695
    %v1898 = vpow.pop %v1897
    %v1899 = vmul.f32 %v1878, 1.442695
    %v1900 = vpow.pop %v1899
    %v1901 = vmul.f32 %v1879, 1.442695
    %v1902 = vpow.pop %v1901
    %v1903 = vmul.f32 %v1880, 1.442695
    %v1904 = vpow.pop %v1903
    %v1905 = vadd.f32 %v1882, 1.0
    %v1906 = vadd.f32 %v1884, 1.0
    %v1907 = vadd.f32 %v1886, 1.0
    %v1908 = vadd.f32 %v1888, 1.0
    %v1909 = vadd.f32 %v1890, 1.0
    %v1910 = vadd.f32 %v1892, 1.0
    %v1911 = vadd.f32 %v1894, 1.0
    %v1912 = vadd.f32 %v1896, 1.0
    %v1913 = vadd.f32 %v1898, 1.0
    %v1914 = vadd.f32 %v1900, 1.0
    %v1915 = vadd.f32 %v1902, 1.0
    %v1916 = vadd.f32 %v1904, 1.0
    %v1917 = vrcp.pop %v1905
    %v1918 = vrcp.pop %v1906
    %v1919 = vrcp.pop %v1907
    %v1920 = vrcp.pop %v1908
    %v1921 = vrcp.pop %v1909
    %v1922 = vrcp.pop %v1910
    %v1923 = vrcp.pop %v1911
    %v1924 = vrcp.pop %v1912
    %v1925 = vrcp.pop %v1913
    %v1926 = vrcp.pop %v1914
    %v1927 = vrcp.pop %v1915
    %v1928 = vrcp.pop %v1916
    %v1929 = vpack.c.bf16 %v1917, %v1917
    %v1930 = vpack.c.bf16 %v1918, %v1918
    %v1931 = vpack.c.bf16 %v1919, %v1919
    %v1932 = vpack.c.bf16 %v1920, %v1920
    %v1933 = vpack.c.bf16 %v1921, %v1921
    %v1934 = vpack.c.bf16 %v1922, %v1922
    %v1935 = vpack.c.bf16 %v1923, %v1923
    %v1936 = vpack.c.bf16 %v1924, %v1924
    %v1937 = vpack.c.bf16 %v1925, %v1925
    %v1938 = vpack.c.bf16 %v1926, %v1926
    %v1939 = vpack.c.bf16 %v1927, %v1927
    %v1940 = vpack.c.bf16 %v1928, %v1928
    %v1941 = vld [vmem:[#allocation8] sm:$0xf]
    %v1942 = vld [vmem:[#allocation8 + $0x4] sm:$0xf]
    %v1943 = vld [vmem:[#allocation8 + $0x8] sm:$0xf]
    %v1944 = vld [vmem:[#allocation8 + $0xc] sm:$0xf]
    %v1945 = vld [vmem:[#allocation8 + $0x10] sm:$0xf]
    %v1946 = vld [vmem:[#allocation8 + $0x14] sm:$0xf]
    %v1947 = vld [vmem:[#allocation8 + $0x18] sm:$0xf]
    %v1948 = vld [vmem:[#allocation8 + $0x1c] sm:$0xf]
    %v1949 = vld [vmem:[#allocation8 + $0x20] sm:$0xf]
    %v1950 = vld [vmem:[#allocation8 + $0x24] sm:$0xf]
    %v1951 = vld [vmem:[#allocation8 + $0x28] sm:$0xf]
    %v1952 = vld [vmem:[#allocation8 + $0x2c] sm:$0xf]
    %v1953 = vld [vmem:[#allocation8 + $0x30] sm:$0xf]
    %v1954 = vld [vmem:[#allocation8 + $0x34] sm:$0xf]
    %v1955 = vld [vmem:[#allocation8 + $0x38] sm:$0xf]
    %v1956 = vld [vmem:[#allocation8 + $0x3c] sm:$0xf]
    %v1957 = vld [vmem:[#allocation8 + $0x40] sm:$0xf]
    %v1958 = vld [vmem:[#allocation8 + $0x44] sm:$0xf]
    %v1959 = vld [vmem:[#allocation8 + $0x48] sm:$0xf]
    %v1960 = vld [vmem:[#allocation8 + $0x4c] sm:$0xf]
    %v1961 = vld [vmem:[#allocation8 + $0x50] sm:$0xf]
    %v1962 = vld [vmem:[#allocation8 + $0x54] sm:$0xf]
    %v1963 = vld [vmem:[#allocation8 + $0x58] sm:$0xf]
    %v1964 = vld [vmem:[#allocation8 + $0x5c] sm:$0xf]
    %v1965 = vld [vmem:[#allocation8 + $0x60] sm:$0xf]
    %v1966 = vld [vmem:[#allocation8 + $0x64] sm:$0xf]
    %v1967 = vld [vmem:[#allocation8 + $0x68] sm:$0xf]
    %v1968 = vld [vmem:[#allocation8 + $0x6c] sm:$0xf]
    %v1969 = vld [vmem:[#allocation8 + $0x70] sm:$0xf]
    %v1970 = vld [vmem:[#allocation8 + $0x74] sm:$0xf]
    %v1971 = vld [vmem:[#allocation8 + $0x78] sm:$0xf]
    %v1972 = vld [vmem:[#allocation8 + $0x7c] sm:$0xf]
    %v1973 = vld [vmem:[#allocation8 + $0x80] sm:$0xf]
    %v1974 = vld [vmem:[#allocation8 + $0x84] sm:$0xf]
    %v1975 = vld [vmem:[#allocation8 + $0x88] sm:$0xf]
    %v1976 = vld [vmem:[#allocation8 + $0x8c] sm:$0xf]
    %v1977 = vld [vmem:[#allocation8 + $0x90] sm:$0xf]
    %v1978 = vld [vmem:[#allocation8 + $0x94] sm:$0xf]
    %v1979 = vld [vmem:[#allocation8 + $0x98] sm:$0xf]
    %v1980 = vld [vmem:[#allocation8 + $0x9c] sm:$0xf]
    %v1981 = vld [vmem:[#allocation8 + $0xa0] sm:$0xf]
    %v1982 = vld [vmem:[#allocation8 + $0xa4] sm:$0xf]
    %v1983 = vld [vmem:[#allocation8 + $0xa8] sm:$0xf]
    %v1984 = vld [vmem:[#allocation8 + $0xac] sm:$0xf]
    %v1985 = vld [vmem:[#allocation8 + $0xb0] sm:$0xf]
    %v1986 = vld [vmem:[#allocation8 + $0xb4] sm:$0xf]
    %v1987 = vld [vmem:[#allocation8 + $0xb8] sm:$0xf]
    %v1988 = vld [vmem:[#allocation8 + $0xbc] sm:$0xf]
    %v1989 = vld [vmem:[#allocation8 + $0xc0] sm:$0xf]
    %v1990 = vld [vmem:[#allocation8 + $0xc4] sm:$0xf]
    %v1991 = vld [vmem:[#allocation8 + $0xc8] sm:$0xf]
    %v1992 = vld [vmem:[#allocation8 + $0xcc] sm:$0xf]
    %v1993 = vld [vmem:[#allocation8 + $0xd0] sm:$0xf]
    %v1994 = vld [vmem:[#allocation8 + $0xd4] sm:$0xf]
    %v1995 = vld [vmem:[#allocation8 + $0xd8] sm:$0xf]
    %v1996 = vld [vmem:[#allocation8 + $0xdc] sm:$0xf]
    %v1997 = vld [vmem:[#allocation8 + $0xe0] sm:$0xf]
    %v1998 = vld [vmem:[#allocation8 + $0xe4] sm:$0xf]
    %v1999 = vld [vmem:[#allocation8 + $0xe8] sm:$0xf]
    %v2000 = vld [vmem:[#allocation8 + $0xec] sm:$0xf]
    %v2001 = vld [vmem:[#allocation8 + $0xf0] sm:$0xf]
    %v2002 = vld [vmem:[#allocation8 + $0xf4] sm:$0xf]
    %v2003 = vld [vmem:[#allocation8 + $0xf8] sm:$0xf]
    %v2004 = vld [vmem:[#allocation8 + $0xfc] sm:$0xf]
    %v2005 = vld [vmem:[#allocation8 + $0x100] sm:$0xf]
    %v2006 = vld [vmem:[#allocation8 + $0x104] sm:$0xf]
    %v2007 = vld [vmem:[#allocation8 + $0x108] sm:$0xf]
    %v2008 = vld [vmem:[#allocation8 + $0x10c] sm:$0xf]
    %v2009 = vld [vmem:[#allocation8 + $0x110] sm:$0xf]
    %v2010 = vld [vmem:[#allocation8 + $0x114] sm:$0xf]
    %v2011 = vld [vmem:[#allocation8 + $0x118] sm:$0xf]
    %v2012 = vld [vmem:[#allocation8 + $0x11c] sm:$0xf]
    %v2013 = vld [vmem:[#allocation8 + $0x120] sm:$0xf]
    %v2014 = vld [vmem:[#allocation8 + $0x124] sm:$0xf]
    %v2015 = vld [vmem:[#allocation8 + $0x128] sm:$0xf]
    %v2016 = vld [vmem:[#allocation8 + $0x12c] sm:$0xf]
    %v2017 = vld [vmem:[#allocation8 + $0x130] sm:$0xf]
    %v2018 = vld [vmem:[#allocation8 + $0x134] sm:$0xf]
    %v2019 = vld [vmem:[#allocation8 + $0x138] sm:$0xf]
    %v2020 = vld [vmem:[#allocation8 + $0x13c] sm:$0xf]
    %v2021 = vld [vmem:[#allocation8 + $0x140] sm:$0xf]
    %v2022 = vld [vmem:[#allocation8 + $0x144] sm:$0xf]
    %v2023 = vld [vmem:[#allocation8 + $0x148] sm:$0xf]
    %v2024 = vld [vmem:[#allocation8 + $0x14c] sm:$0xf]
    %v2025 = vld [vmem:[#allocation8 + $0x150] sm:$0xf]
    %v2026 = vld [vmem:[#allocation8 + $0x154] sm:$0xf]
    %v2027 = vld [vmem:[#allocation8 + $0x158] sm:$0xf]
    %v2028 = vld [vmem:[#allocation8 + $0x15c] sm:$0xf]
    %v2029 = vld [vmem:[#allocation8 + $0x160] sm:$0xf]
    %v2030 = vld [vmem:[#allocation8 + $0x164] sm:$0xf]
    %v2031 = vld [vmem:[#allocation8 + $0x168] sm:$0xf]
    %v2032 = vld [vmem:[#allocation8 + $0x16c] sm:$0xf]
    %v2033 = vld [vmem:[#allocation8 + $0x170] sm:$0xf]
    %v2034 = vld [vmem:[#allocation8 + $0x174] sm:$0xf]
    %v2035 = vld [vmem:[#allocation8 + $0x178] sm:$0xf]
    %v2036 = vld [vmem:[#allocation8 + $0x17c] sm:$0xf]
    %v2037 = vld [vmem:[#allocation8 + $0x180] sm:$0xf]
    %v2038 = vld [vmem:[#allocation8 + $0x184] sm:$0xf]
    %v2039 = vld [vmem:[#allocation8 + $0x188] sm:$0xf]
    %v2040 = vld [vmem:[#allocation8 + $0x18c] sm:$0xf]
    %v2041 = vld [vmem:[#allocation8 + $0x190] sm:$0xf]
    %v2042 = vld [vmem:[#allocation8 + $0x194] sm:$0xf]
    %v2043 = vld [vmem:[#allocation8 + $0x198] sm:$0xf]
    %v2044 = vld [vmem:[#allocation8 + $0x19c] sm:$0xf]
    %v2045 = vld [vmem:[#allocation8 + $0x1a0] sm:$0xf]
    %v2046 = vld [vmem:[#allocation8 + $0x1a4] sm:$0xf]
    %v2047 = vld [vmem:[#allocation8 + $0x1a8] sm:$0xf]
    %v2048 = vld [vmem:[#allocation8 + $0x1ac] sm:$0xf]
    %v2049 = vld [vmem:[#allocation8 + $0x1b0] sm:$0xf]
    %v2050 = vld [vmem:[#allocation8 + $0x1b4] sm:$0xf]
    %v2051 = vld [vmem:[#allocation8 + $0x1b8] sm:$0xf]
    %v2052 = vld [vmem:[#allocation8 + $0x1bc] sm:$0xf]
    %v2053 = vld [vmem:[#allocation8 + $0x1c0] sm:$0xf]
    %v2054 = vld [vmem:[#allocation8 + $0x1c4] sm:$0xf]
    %v2055 = vld [vmem:[#allocation8 + $0x1c8] sm:$0xf]
    %v2056 = vld [vmem:[#allocation8 + $0x1cc] sm:$0xf]
    %v2057 = vld [vmem:[#allocation8 + $0x1d0] sm:$0xf]
    %v2058 = vld [vmem:[#allocation8 + $0x1d4] sm:$0xf]
    %v2059 = vld [vmem:[#allocation8 + $0x1d8] sm:$0xf]
    %v2060 = vld [vmem:[#allocation8 + $0x1dc] sm:$0xf]
    %v2061 = vld [vmem:[#allocation8 + $0x1e0] sm:$0xf]
    %v2062 = vld [vmem:[#allocation8 + $0x1e4] sm:$0xf]
    %v2063 = vld [vmem:[#allocation8 + $0x1e8] sm:$0xf]
    %v2064 = vld [vmem:[#allocation8 + $0x1ec] sm:$0xf]
    %v2065 = vld [vmem:[#allocation8 + $0x1f0] sm:$0xf]
    %v2066 = vld [vmem:[#allocation8 + $0x1f4] sm:$0xf]
    %v2067 = vld [vmem:[#allocation8 + $0x1f8] sm:$0xf]
    %v2068 = vld [vmem:[#allocation8 + $0x1fc] sm:$0xf]
    %v2069 = vld [vmem:[#allocation8 + $0x200] sm:$0xf]
    %v2070 = vld [vmem:[#allocation8 + $0x204] sm:$0xf]
    %v2071 = vld [vmem:[#allocation8 + $0x208] sm:$0xf]
    %v2072 = vld [vmem:[#allocation8 + $0x20c] sm:$0xf]
    %v2073 = vld [vmem:[#allocation8 + $0x210] sm:$0xf]
    %v2074 = vld [vmem:[#allocation8 + $0x214] sm:$0xf]
    %v2075 = vld [vmem:[#allocation8 + $0x218] sm:$0xf]
    %v2076 = vld [vmem:[#allocation8 + $0x21c] sm:$0xf]
    %v2077 = vld [vmem:[#allocation8 + $0x220] sm:$0xf]
    %v2078 = vld [vmem:[#allocation8 + $0x224] sm:$0xf]
    %v2079 = vld [vmem:[#allocation8 + $0x228] sm:$0xf]
    %v2080 = vld [vmem:[#allocation8 + $0x22c] sm:$0xf]
    %v2081 = vld [vmem:[#allocation8 + $0x230] sm:$0xf]
    %v2082 = vld [vmem:[#allocation8 + $0x234] sm:$0xf]
    %v2083 = vld [vmem:[#allocation8 + $0x238] sm:$0xf]
    %v2084 = vld [vmem:[#allocation8 + $0x23c] sm:$0xf]
    %v2085 = vld [vmem:[#allocation8 + $0x240] sm:$0xf]
    %v2086 = vld [vmem:[#allocation8 + $0x244] sm:$0xf]
    %v2087 = vld [vmem:[#allocation8 + $0x248] sm:$0xf]
    %v2088 = vld [vmem:[#allocation8 + $0x24c] sm:$0xf]
    %v2089 = vld [vmem:[#allocation8 + $0x250] sm:$0xf]
    %v2090 = vld [vmem:[#allocation8 + $0x254] sm:$0xf]
    %v2091 = vld [vmem:[#allocation8 + $0x258] sm:$0xf]
    %v2092 = vld [vmem:[#allocation8 + $0x25c] sm:$0xf]
    %v2093 = vld [vmem:[#allocation8 + $0x260] sm:$0xf]
    %v2094 = vld [vmem:[#allocation8 + $0x264] sm:$0xf]
    %v2095 = vld [vmem:[#allocation8 + $0x268] sm:$0xf]
    %v2096 = vld [vmem:[#allocation8 + $0x26c] sm:$0xf]
    %v2097 = vld [vmem:[#allocation8 + $0x270] sm:$0xf]
    %v2098 = vld [vmem:[#allocation8 + $0x274] sm:$0xf]
    %v2099 = vld [vmem:[#allocation8 + $0x278] sm:$0xf]
    %v2100 = vld [vmem:[#allocation8 + $0x27c] sm:$0xf]
    %v2101 = vld [vmem:[#allocation8 + $0x280] sm:$0xf]
    %v2102 = vld [vmem:[#allocation8 + $0x284] sm:$0xf]
    %v2103 = vld [vmem:[#allocation8 + $0x288] sm:$0xf]
    %v2104 = vld [vmem:[#allocation8 + $0x28c] sm:$0xf]
    %v2105 = vld [vmem:[#allocation8 + $0x290] sm:$0xf]
    %v2106 = vld [vmem:[#allocation8 + $0x294] sm:$0xf]
    %v2107 = vld [vmem:[#allocation8 + $0x298] sm:$0xf]
    %v2108 = vld [vmem:[#allocation8 + $0x29c] sm:$0xf]
    %v2109 = vld [vmem:[#allocation8 + $0x2a0] sm:$0xf]
    %v2110 = vld [vmem:[#allocation8 + $0x2a4] sm:$0xf]
    %v2111 = vld [vmem:[#allocation8 + $0x2a8] sm:$0xf]
    %v2112 = vld [vmem:[#allocation8 + $0x2ac] sm:$0xf]
    %v2113 = vld [vmem:[#allocation8 + $0x2b0] sm:$0xf]
    %v2114 = vld [vmem:[#allocation8 + $0x2b4] sm:$0xf]
    %v2115 = vld [vmem:[#allocation8 + $0x2b8] sm:$0xf]
    %v2116 = vld [vmem:[#allocation8 + $0x2bc] sm:$0xf]
    %v2117 = vld [vmem:[#allocation8 + $0x2c0] sm:$0xf]
    %v2118 = vld [vmem:[#allocation8 + $0x2c4] sm:$0xf]
    %v2119 = vld [vmem:[#allocation8 + $0x2c8] sm:$0xf]
    %v2120 = vld [vmem:[#allocation8 + $0x2cc] sm:$0xf]
    %v2121 = vld [vmem:[#allocation8 + $0x2d0] sm:$0xf]
    %v2122 = vld [vmem:[#allocation8 + $0x2d4] sm:$0xf]
    %v2123 = vld [vmem:[#allocation8 + $0x2d8] sm:$0xf]
    %v2124 = vld [vmem:[#allocation8 + $0x2dc] sm:$0xf]
    %v2125 = vld [vmem:[#allocation8 + $0x2e0] sm:$0xf]
    %v2126 = vld [vmem:[#allocation8 + $0x2e4] sm:$0xf]
    %v2127 = vld [vmem:[#allocation8 + $0x2e8] sm:$0xf]
    %v2128 = vld [vmem:[#allocation8 + $0x2ec] sm:$0xf]
    %v2129 = vld [vmem:[#allocation8 + $0x2f0] sm:$0xf]
    %v2130 = vld [vmem:[#allocation8 + $0x2f4] sm:$0xf]
    %v2131 = vld [vmem:[#allocation8 + $0x2f8] sm:$0xf]
    %v2132 = vld [vmem:[#allocation8 + $0x2fc] sm:$0xf]
    %v2133 = vld [vmem:[%s4] sm:$0x1]
    %v2135 = vlaneseq
    %v2136 = vshrl.u32 %v2135, 7
    %v2137 = vsub.s32 0, %v2136
    %v2138 = vrot.slane %v2133, %v2137
    %v2332 = vunpack.c.l.b16 %v1941
    %v2333 = vunpack.c.l.b16 %v1942
    %v2334 = vunpack.c.l.b16 %v1943
    %v2335 = vunpack.c.l.b16 %v1944
    %v2336 = vunpack.c.l.b16 %v1945
    %v2337 = vunpack.c.l.b16 %v1946
    %v2338 = vunpack.c.l.b16 %v1947
    %v2339 = vunpack.c.l.b16 %v1948
    %v2340 = vunpack.c.l.b16 %v1949
    %v2341 = vunpack.c.l.b16 %v1950
    %v2342 = vunpack.c.l.b16 %v1951
    %v2343 = vunpack.c.l.b16 %v1952
    %v2344 = vunpack.c.l.b16 %v1953
    %v2345 = vunpack.c.l.b16 %v1954
    %v2346 = vunpack.c.l.b16 %v1955
    %v2347 = vunpack.c.l.b16 %v1956
    %v2348 = vunpack.c.l.b16 %v1957
    %v2349 = vunpack.c.l.b16 %v1958
    %v2350 = vunpack.c.l.b16 %v1959
    %v2351 = vunpack.c.l.b16 %v1960
    %v2352 = vunpack.c.l.b16 %v1961
    %v2353 = vunpack.c.l.b16 %v1962
    %v2354 = vunpack.c.l.b16 %v1963
    %v2355 = vunpack.c.l.b16 %v1964
    %v2356 = vunpack.c.l.b16 %v1965
    %v2357 = vunpack.c.l.b16 %v1966
    %v2358 = vunpack.c.l.b16 %v1967
    %v2359 = vunpack.c.l.b16 %v1968
    %v2360 = vunpack.c.l.b16 %v1969
    %v2361 = vunpack.c.l.b16 %v1970
    %v2362 = vunpack.c.l.b16 %v1971
    %v2363 = vunpack.c.l.b16 %v1972
    %v2364 = vunpack.c.l.b16 %v1973
    %v2365 = vunpack.c.l.b16 %v1974
    %v2366 = vunpack.c.l.b16 %v1975
    %v2367 = vunpack.c.l.b16 %v1976
    %v2368 = vunpack.c.l.b16 %v1977
    %v2369 = vunpack.c.l.b16 %v1978
    %v2370 = vunpack.c.l.b16 %v1979
    %v2371 = vunpack.c.l.b16 %v1980
    %v2372 = vunpack.c.l.b16 %v1981
    %v2373 = vunpack.c.l.b16 %v1982
    %v2374 = vunpack.c.l.b16 %v1983
    %v2375 = vunpack.c.l.b16 %v1984
    %v2376 = vunpack.c.l.b16 %v1985
    %v2377 = vunpack.c.l.b16 %v1986
    %v2378 = vunpack.c.l.b16 %v1987
    %v2379 = vunpack.c.l.b16 %v1988
    %v2380 = vunpack.c.l.b16 %v1989
    %v2381 = vunpack.c.l.b16 %v1990
    %v2382 = vunpack.c.l.b16 %v1991
    %v2383 = vunpack.c.l.b16 %v1992
    %v2384 = vunpack.c.l.b16 %v1993
    %v2385 = vunpack.c.l.b16 %v1994
    %v2386 = vunpack.c.l.b16 %v1995
    %v2387 = vunpack.c.l.b16 %v1996
    %v2388 = vunpack.c.l.b16 %v1997
    %v2389 = vunpack.c.l.b16 %v1998
    %v2390 = vunpack.c.l.b16 %v1999
    %v2391 = vunpack.c.l.b16 %v2000
    %v2392 = vunpack.c.l.b16 %v2001
    %v2393 = vunpack.c.l.b16 %v2002
    %v2394 = vunpack.c.l.b16 %v2003
    %v2395 = vunpack.c.l.b16 %v2004
    %v2396 = vunpack.c.l.b16 %v2005
    %v2397 = vunpack.c.l.b16 %v2006
    %v2398 = vunpack.c.l.b16 %v2007
    %v2399 = vunpack.c.l.b16 %v2008
    %v2400 = vunpack.c.l.b16 %v2009
    %v2401 = vunpack.c.l.b16 %v2010
    %v2402 = vunpack.c.l.b16 %v2011
    %v2403 = vunpack.c.l.b16 %v2012
    %v2404 = vunpack.c.l.b16 %v2013
    %v2405 = vunpack.c.l.b16 %v2014
    %v2406 = vunpack.c.l.b16 %v2015
    %v2407 = vunpack.c.l.b16 %v2016
    %v2408 = vunpack.c.l.b16 %v2017
    %v2409 = vunpack.c.l.b16 %v2018
    %v2410 = vunpack.c.l.b16 %v2019
    %v2411 = vunpack.c.l.b16 %v2020
    %v2412 = vunpack.c.l.b16 %v2021
    %v2413 = vunpack.c.l.b16 %v2022
    %v2414 = vunpack.c.l.b16 %v2023
    %v2415 = vunpack.c.l.b16 %v2024
    %v2416 = vunpack.c.l.b16 %v2025
    %v2417 = vunpack.c.l.b16 %v2026
    %v2418 = vunpack.c.l.b16 %v2027
    %v2419 = vunpack.c.l.b16 %v2028
    %v2420 = vunpack.c.l.b16 %v2029
    %v2421 = vunpack.c.l.b16 %v2030
    %v2422 = vunpack.c.l.b16 %v2031
    %v2423 = vunpack.c.l.b16 %v2032
    %v2424 = vunpack.c.l.b16 %v2033
    %v2425 = vunpack.c.l.b16 %v2034
    %v2426 = vunpack.c.l.b16 %v2035
    %v2427 = vunpack.c.l.b16 %v2036
    %v2428 = vunpack.c.l.b16 %v2037
    %v2429 = vunpack.c.l.b16 %v2038
    %v2430 = vunpack.c.l.b16 %v2039
    %v2431 = vunpack.c.l.b16 %v2040
    %v2432 = vunpack.c.l.b16 %v2041
    %v2433 = vunpack.c.l.b16 %v2042
    %v2434 = vunpack.c.l.b16 %v2043
    %v2435 = vunpack.c.l.b16 %v2044
    %v2436 = vunpack.c.l.b16 %v2045
    %v2437 = vunpack.c.l.b16 %v2046
    %v2438 = vunpack.c.l.b16 %v2047
    %v2439 = vunpack.c.l.b16 %v2048
    %v2440 = vunpack.c.l.b16 %v2049
    %v2441 = vunpack.c.l.b16 %v2050
    %v2442 = vunpack.c.l.b16 %v2051
    %v2443 = vunpack.c.l.b16 %v2052
    %v2444 = vunpack.c.l.b16 %v2053
    %v2445 = vunpack.c.l.b16 %v2054
    %v2446 = vunpack.c.l.b16 %v2055
    %v2447 = vunpack.c.l.b16 %v2056
    %v2448 = vunpack.c.l.b16 %v2057
    %v2449 = vunpack.c.l.b16 %v2058
    %v2450 = vunpack.c.l.b16 %v2059
    %v2451 = vunpack.c.l.b16 %v2060
    %v2452 = vunpack.c.l.b16 %v2061
    %v2453 = vunpack.c.l.b16 %v2062
    %v2454 = vunpack.c.l.b16 %v2063
    %v2455 = vunpack.c.l.b16 %v2064
    %v2456 = vunpack.c.l.b16 %v2065
    %v2457 = vunpack.c.l.b16 %v2066
    %v2458 = vunpack.c.l.b16 %v2067
    %v2459 = vunpack.c.l.b16 %v2068
    %v2460 = vunpack.c.l.b16 %v2069
    %v2461 = vunpack.c.l.b16 %v2070
    %v2462 = vunpack.c.l.b16 %v2071
    %v2463 = vunpack.c.l.b16 %v2072
    %v2464 = vunpack.c.l.b16 %v2073
    %v2465 = vunpack.c.l.b16 %v2074
    %v2466 = vunpack.c.l.b16 %v2075
    %v2467 = vunpack.c.l.b16 %v2076
    %v2468 = vunpack.c.l.b16 %v2077
    %v2469 = vunpack.c.l.b16 %v2078
    %v2470 = vunpack.c.l.b16 %v2079
    %v2471 = vunpack.c.l.b16 %v2080
    %v2472 = vunpack.c.l.b16 %v2081
    %v2473 = vunpack.c.l.b16 %v2082
    %v2474 = vunpack.c.l.b16 %v2083
    %v2475 = vunpack.c.l.b16 %v2084
    %v2476 = vunpack.c.l.b16 %v2085
    %v2477 = vunpack.c.l.b16 %v2086
    %v2478 = vunpack.c.l.b16 %v2087
    %v2479 = vunpack.c.l.b16 %v2088
    %v2480 = vunpack.c.l.b16 %v2089
    %v2481 = vunpack.c.l.b16 %v2090
    %v2482 = vunpack.c.l.b16 %v2091
    %v2483 = vunpack.c.l.b16 %v2092
    %v2484 = vunpack.c.l.b16 %v2093
    %v2485 = vunpack.c.l.b16 %v2094
    %v2486 = vunpack.c.l.b16 %v2095
    %v2487 = vunpack.c.l.b16 %v2096
    %v2488 = vunpack.c.l.b16 %v2097
    %v2489 = vunpack.c.l.b16 %v2098
    %v2490 = vunpack.c.l.b16 %v2099
    %v2491 = vunpack.c.l.b16 %v2100
    %v2492 = vunpack.c.l.b16 %v2101
    %v2493 = vunpack.c.l.b16 %v2102
    %v2494 = vunpack.c.l.b16 %v2103
    %v2495 = vunpack.c.l.b16 %v2104
    %v2496 = vunpack.c.l.b16 %v2105
    %v2497 = vunpack.c.l.b16 %v2106
    %v2498 = vunpack.c.l.b16 %v2107
    %v2499 = vunpack.c.l.b16 %v2108
    %v2500 = vunpack.c.l.b16 %v2109
    %v2501 = vunpack.c.l.b16 %v2110
    %v2502 = vunpack.c.l.b16 %v2111
    %v2503 = vunpack.c.l.b16 %v2112
    %v2504 = vunpack.c.l.b16 %v2113
    %v2505 = vunpack.c.l.b16 %v2114
    %v2506 = vunpack.c.l.b16 %v2115
    %v2507 = vunpack.c.l.b16 %v2116
    %v2508 = vunpack.c.l.b16 %v2117
    %v2509 = vunpack.c.l.b16 %v2118
    %v2510 = vunpack.c.l.b16 %v2119
    %v2511 = vunpack.c.l.b16 %v2120
    %v2512 = vunpack.c.l.b16 %v2121
    %v2513 = vunpack.c.l.b16 %v2122
    %v2514 = vunpack.c.l.b16 %v2123
    %v2515 = vunpack.c.l.b16 %v2124
    %v2516 = vunpack.c.l.b16 %v2125
    %v2517 = vunpack.c.l.b16 %v2126
    %v2518 = vunpack.c.l.b16 %v2127
    %v2519 = vunpack.c.l.b16 %v2128
    %v2520 = vunpack.c.l.b16 %v2129
    %v2521 = vunpack.c.l.b16 %v2130
    %v2522 = vunpack.c.l.b16 %v2131
    %v2523 = vunpack.c.l.b16 %v2132
    %v2524 = vpack.c.b16 %v2333, %v2332
    %v2525 = vpack.c.b16 %v2335, %v2334
    %v2526 = vpack.c.b16 %v2337, %v2336
    %v2527 = vpack.c.b16 %v2339, %v2338
    %v2528 = vpack.c.b16 %v2341, %v2340
    %v2529 = vpack.c.b16 %v2343, %v2342
    %v2530 = vpack.c.b16 %v2345, %v2344
    %v2531 = vpack.c.b16 %v2347, %v2346
    %v2532 = vpack.c.b16 %v2349, %v2348
    %v2533 = vpack.c.b16 %v2351, %v2350
    %v2534 = vpack.c.b16 %v2353, %v2352
    %v2535 = vpack.c.b16 %v2355, %v2354
    %v2536 = vpack.c.b16 %v2357, %v2356
    %v2537 = vpack.c.b16 %v2359, %v2358
    %v2538 = vpack.c.b16 %v2361, %v2360
    %v2539 = vpack.c.b16 %v2363, %v2362
    %v2540 = vpack.c.b16 %v2365, %v2364
    %v2541 = vpack.c.b16 %v2367, %v2366
    %v2542 = vpack.c.b16 %v2369, %v2368
    %v2543 = vpack.c.b16 %v2371, %v2370
    %v2544 = vpack.c.b16 %v2373, %v2372
    %v2545 = vpack.c.b16 %v2375, %v2374
    %v2546 = vpack.c.b16 %v2377, %v2376
    %v2547 = vpack.c.b16 %v2379, %v2378
    %v2548 = vpack.c.b16 %v2381, %v2380
    %v2549 = vpack.c.b16 %v2383, %v2382
    %v2550 = vpack.c.b16 %v2385, %v2384
    %v2551 = vpack.c.b16 %v2387, %v2386
    %v2552 = vpack.c.b16 %v2389, %v2388
    %v2553 = vpack.c.b16 %v2391, %v2390
    %v2554 = vpack.c.b16 %v2393, %v2392
    %v2555 = vpack.c.b16 %v2395, %v2394
    %v2556 = vpack.c.b16 %v2397, %v2396
    %v2557 = vpack.c.b16 %v2399, %v2398
    %v2558 = vpack.c.b16 %v2401, %v2400
    %v2559 = vpack.c.b16 %v2403, %v2402
    %v2560 = vpack.c.b16 %v2405, %v2404
    %v2561 = vpack.c.b16 %v2407, %v2406
    %v2562 = vpack.c.b16 %v2409, %v2408
    %v2563 = vpack.c.b16 %v2411, %v2410
    %v2564 = vpack.c.b16 %v2413, %v2412
    %v2565 = vpack.c.b16 %v2415, %v2414
    %v2566 = vpack.c.b16 %v2417, %v2416
    %v2567 = vpack.c.b16 %v2419, %v2418
    %v2568 = vpack.c.b16 %v2421, %v2420
    %v2569 = vpack.c.b16 %v2423, %v2422
    %v2570 = vpack.c.b16 %v2425, %v2424
    %v2571 = vpack.c.b16 %v2427, %v2426
    %v2572 = vpack.c.b16 %v2429, %v2428
    %v2573 = vpack.c.b16 %v2431, %v2430
    %v2574 = vpack.c.b16 %v2433, %v2432
    %v2575 = vpack.c.b16 %v2435, %v2434
    %v2576 = vpack.c.b16 %v2437, %v2436
    %v2577 = vpack.c.b16 %v2439, %v2438
    %v2578 = vpack.c.b16 %v2441, %v2440
    %v2579 = vpack.c.b16 %v2443, %v2442
    %v2580 = vpack.c.b16 %v2445, %v2444
    %v2581 = vpack.c.b16 %v2447, %v2446
    %v2582 = vpack.c.b16 %v2449, %v2448
    %v2583 = vpack.c.b16 %v2451, %v2450
    %v2584 = vpack.c.b16 %v2453, %v2452
    %v2585 = vpack.c.b16 %v2455, %v2454
    %v2586 = vpack.c.b16 %v2457, %v2456
    %v2587 = vpack.c.b16 %v2459, %v2458
    %v2588 = vpack.c.b16 %v2461, %v2460
    %v2589 = vpack.c.b16 %v2463, %v2462
    %v2590 = vpack.c.b16 %v2465, %v2464
    %v2591 = vpack.c.b16 %v2467, %v2466
    %v2592 = vpack.c.b16 %v2469, %v2468
    %v2593 = vpack.c.b16 %v2471, %v2470
    %v2594 = vpack.c.b16 %v2473, %v2472
    %v2595 = vpack.c.b16 %v2475, %v2474
    %v2596 = vpack.c.b16 %v2477, %v2476
    %v2597 = vpack.c.b16 %v2479, %v2478
    %v2598 = vpack.c.b16 %v2481, %v2480
    %v2599 = vpack.c.b16 %v2483, %v2482
    %v2600 = vpack.c.b16 %v2485, %v2484
    %v2601 = vpack.c.b16 %v2487, %v2486
    %v2602 = vpack.c.b16 %v2489, %v2488
    %v2603 = vpack.c.b16 %v2491, %v2490
    %v2604 = vpack.c.b16 %v2493, %v2492
    %v2605 = vpack.c.b16 %v2495, %v2494
    %v2606 = vpack.c.b16 %v2497, %v2496
    %v2607 = vpack.c.b16 %v2499, %v2498
    %v2608 = vpack.c.b16 %v2501, %v2500
    %v2609 = vpack.c.b16 %v2503, %v2502
    %v2610 = vpack.c.b16 %v2505, %v2504
    %v2611 = vpack.c.b16 %v2507, %v2506
    %v2612 = vpack.c.b16 %v2509, %v2508
    %v2613 = vpack.c.b16 %v2511, %v2510
    %v2614 = vpack.c.b16 %v2513, %v2512
    %v2615 = vpack.c.b16 %v2515, %v2514
    %v2616 = vpack.c.b16 %v2517, %v2516
    %v2617 = vpack.c.b16 %v2519, %v2518
    %v2618 = vpack.c.b16 %v2521, %v2520
    %v2619 = vpack.c.b16 %v2523, %v2522
    %2716 = vmatprep.subr.bf16.mxu0 0
    %2717 = vmatpush1.bf16.msra.mxu0 %v2524
    %2718 = vmatprep.subr.bf16.mxu0 0
    %2719 = vmatpush1.bf16.msra.mxu0 %v2525
    %2720 = vmatprep.subr.bf16.mxu0 0
    %2721 = vmatpush1.bf16.msra.mxu0 %v2526
    %2722 = vmatprep.subr.bf16.mxu0 0
    %2723 = vmatpush1.bf16.msra.mxu0 %v2527
    %2724 = vmatprep.subr.bf16.mxu0 0
    %2725 = vmatpush1.bf16.msra.mxu0 %v2528
    %2726 = vmatprep.subr.bf16.mxu0 0
    %2727 = vmatpush1.bf16.msra.mxu0 %v2529
    %2728 = vmatprep.subr.bf16.mxu0 0
    %2729 = vmatpush1.bf16.msra.mxu0 %v2530
    %2730 = vmatprep.subr.bf16.mxu0 0
    %2731 = vmatpush1.bf16.msra.mxu0 %v2531
    %2732 = vmatprep.subr.bf16.mxu0 0
    %2733 = vmatpush1.bf16.msra.mxu0 %v2532
    %2734 = vmatprep.subr.bf16.mxu0 0
    %2735 = vmatpush1.bf16.msra.mxu0 %v2533
    %2736 = vmatprep.subr.bf16.mxu0 0
    %2737 = vmatpush1.bf16.msra.mxu0 %v2534
    %2738 = vmatprep.subr.bf16.mxu0 0
    %2739 = vmatpush1.bf16.msra.mxu0 %v2535
    %2740 = vmatprep.subr.bf16.mxu0 0
    %2741 = vmatpush1.bf16.msra.mxu0 %v2536
    %2742 = vmatprep.subr.bf16.mxu0 0
    %2743 = vmatpush1.bf16.msra.mxu0 %v2537
    %2744 = vmatprep.subr.bf16.mxu0 0
    %2745 = vmatpush1.bf16.msra.mxu0 %v2538
    %2746 = vmatprep.subr.bf16.mxu0 0
    %2747 = vmatpush1.bf16.msra.mxu0 %v2539
    %2748 = vmatprep.mubr.bf16.mxu0 %v1930
    %2749 = vmatmul.mubr.bf16.gmra.mrb[0].mxu0 %v1929
    %v2750 = vpop.f32.mrb[0].mxu0
    %v2751 = vadd.f32 %v2138, %v2750
    %v2752 = vpop.f32.mrb[0].mxu0
    %v2753 = vpop.f32.mrb[0].mxu0
    %v2754 = vpop.f32.mrb[0].mxu0
    %2755 = vdwg.mxu0
    %2756 = vmatprep.subr.bf16.mxu0 0
    %2757 = vmatpush1.bf16.msra.mxu0 %v2540
    %2758 = vmatprep.subr.bf16.mxu0 0
    %2759 = vmatpush1.bf16.msra.mxu0 %v2541
    %2760 = vmatprep.subr.bf16.mxu0 0
    %2761 = vmatpush1.bf16.msra.mxu0 %v2542
    %2762 = vmatprep.subr.bf16.mxu0 0
    %2763 = vmatpush1.bf16.msra.mxu0 %v2543
    %2764 = vmatprep.subr.bf16.mxu0 0
    %2765 = vmatpush1.bf16.msra.mxu0 %v2544
    %2766 = vmatprep.subr.bf16.mxu0 0
    %2767 = vmatpush1.bf16.msra.mxu0 %v2545
    %2768 = vmatprep.subr.bf16.mxu0 0
    %2769 = vmatpush1.bf16.msra.mxu0 %v2546
    %2770 = vmatprep.subr.bf16.mxu0 0
    %2771 = vmatpush1.bf16.msra.mxu0 %v2547
    %2772 = vmatprep.subr.bf16.mxu0 0
    %2773 = vmatpush1.bf16.msra.mxu0 %v2548
    %2774 = vmatprep.subr.bf16.mxu0 0
    %2775 = vmatpush1.bf16.msra.mxu0 %v2549
    %2776 = vmatprep.subr.bf16.mxu0 0
    %2777 = vmatpush1.bf16.msra.mxu0 %v2550
    %2778 = vmatprep.subr.bf16.mxu0 0
    %2779 = vmatpush1.bf16.msra.mxu0 %v2551
    %2780 = vmatprep.subr.bf16.mxu0 0
    %2781 = vmatpush1.bf16.msra.mxu0 %v2552
    %2782 = vmatprep.subr.bf16.mxu0 0
    %2783 = vmatpush1.bf16.msra.mxu0 %v2553
    %2784 = vmatprep.subr.bf16.mxu0 0
    %2785 = vmatpush1.bf16.msra.mxu0 %v2554
    %2786 = vmatprep.subr.bf16.mxu0 0
    %2787 = vmatpush1.bf16.msra.mxu0 %v2555
    %2788 = vmatprep.mubr.bf16.mxu0 %v1932
    %2789 = vmatmul.mubr.bf16.gmra.mrb[0].mxu0 %v1931
    %v2790 = vpop.f32.mrb[0].mxu0
    %v2791 = vadd.f32 %v2751, %v2790
    %v2792 = vpop.f32.mrb[0].mxu0
    %v2793 = vpop.f32.mrb[0].mxu0
    %v2794 = vpop.f32.mrb[0].mxu0
    %2795 = vdwg.mxu0
    %2796 = vmatprep.subr.bf16.mxu0 0
    %2797 = vmatpush1.bf16.msra.mxu0 %v2556
    %2798 = vmatprep.subr.bf16.mxu0 0
    %2799 = vmatpush1.bf16.msra.mxu0 %v2557
    %2800 = vmatprep.subr.bf16.mxu0 0
    %2801 = vmatpush1.bf16.msra.mxu0 %v2558
    %2802 = vmatprep.subr.bf16.mxu0 0
    %2803 = vmatpush1.bf16.msra.mxu0 %v2559
    %2804 = vmatprep.subr.bf16.mxu0 0
    %2805 = vmatpush1.bf16.msra.mxu0 %v2560
    %2806 = vmatprep.subr.bf16.mxu0 0
    %2807 = vmatpush1.bf16.msra.mxu0 %v2561
    %2808 = vmatprep.subr.bf16.mxu0 0
    %2809 = vmatpush1.bf16.msra.mxu0 %v2562
    %2810 = vmatprep.subr.bf16.mxu0 0
    %2811 = vmatpush1.bf16.msra.mxu0 %v2563
    %2812 = vmatprep.subr.bf16.mxu0 0
    %2813 = vmatpush1.bf16.msra.mxu0 %v2564
    %2814 = vmatprep.subr.bf16.mxu0 0
    %2815 = vmatpush1.bf16.msra.mxu0 %v2565
    %2816 = vmatprep.subr.bf16.mxu0 0
    %2817 = vmatpush1.bf16.msra.mxu0 %v2566
    %2818 = vmatprep.subr.bf16.mxu0 0
    %2819 = vmatpush1.bf16.msra.mxu0 %v2567
    %2820 = vmatprep.subr.bf16.mxu0 0
    %2821 = vmatpush1.bf16.msra.mxu0 %v2568
    %2822 = vmatprep.subr.bf16.mxu0 0
    %2823 = vmatpush1.bf16.msra.mxu0 %v2569
    %2824 = vmatprep.subr.bf16.mxu0 0
    %2825 = vmatpush1.bf16.msra.mxu0 %v2570
    %2826 = vmatprep.subr.bf16.mxu0 0
    %2827 = vmatpush1.bf16.msra.mxu0 %v2571
    %2828 = vmatprep.mubr.bf16.mxu0 %v1934
    %2829 = vmatmul.mubr.bf16.gmra.mrb[0].mxu0 %v1933
    %v2830 = vpop.f32.mrb[0].mxu0
    %v2831 = vadd.f32 %v2791, %v2830
    %v2832 = vpop.f32.mrb[0].mxu0
    %v2833 = vpop.f32.mrb[0].mxu0
    %v2834 = vpop.f32.mrb[0].mxu0
    %2835 = vdwg.mxu0
    %2836 = vmatprep.subr.bf16.mxu0 0
    %2837 = vmatpush1.bf16.msra.mxu0 %v2572
    %2838 = vmatprep.subr.bf16.mxu0 0
    %2839 = vmatpush1.bf16.msra.mxu0 %v2573
    %2840 = vmatprep.subr.bf16.mxu0 0
    %2841 = vmatpush1.bf16.msra.mxu0 %v2574
    %2842 = vmatprep.subr.bf16.mxu0 0
    %2843 = vmatpush1.bf16.msra.mxu0 %v2575
    %2844 = vmatprep.subr.bf16.mxu0 0
    %2845 = vmatpush1.bf16.msra.mxu0 %v2576
    %2846 = vmatprep.subr.bf16.mxu0 0
    %2847 = vmatpush1.bf16.msra.mxu0 %v2577
    %2848 = vmatprep.subr.bf16.mxu0 0
    %2849 = vmatpush1.bf16.msra.mxu0 %v2578
    %2850 = vmatprep.subr.bf16.mxu0 0
    %2851 = vmatpush1.bf16.msra.mxu0 %v2579
    %2852 = vmatprep.subr.bf16.mxu0 0
    %2853 = vmatpush1.bf16.msra.mxu0 %v2580
    %2854 = vmatprep.subr.bf16.mxu0 0
    %2855 = vmatpush1.bf16.msra.mxu0 %v2581
    %2856 = vmatprep.subr.bf16.mxu0 0
    %2857 = vmatpush1.bf16.msra.mxu0 %v2582
    %2858 = vmatprep.subr.bf16.mxu0 0
    %2859 = vmatpush1.bf16.msra.mxu0 %v2583
    %2860 = vmatprep.subr.bf16.mxu0 0
    %2861 = vmatpush1.bf16.msra.mxu0 %v2584
    %2862 = vmatprep.subr.bf16.mxu0 0
    %2863 = vmatpush1.bf16.msra.mxu0 %v2585
    %2864 = vmatprep.subr.bf16.mxu0 0
    %2865 = vmatpush1.bf16.msra.mxu0 %v2586
    %2866 = vmatprep.subr.bf16.mxu0 0
    %2867 = vmatpush1.bf16.msra.mxu0 %v2587
    %2868 = vmatprep.mubr.bf16.mxu0 %v1936
    %2869 = vmatmul.mubr.bf16.gmra.mrb[0].mxu0 %v1935
    %v2870 = vpop.f32.mrb[0].mxu0
    %v2871 = vadd.f32 %v2831, %v2870
    %v2872 = vpop.f32.mrb[0].mxu0
    %v2873 = vpop.f32.mrb[0].mxu0
    %v2874 = vpop.f32.mrb[0].mxu0
    %2875 = vdwg.mxu0
    %2876 = vmatprep.subr.bf16.mxu0 0
    %2877 = vmatpush1.bf16.msra.mxu0 %v2588
    %2878 = vmatprep.subr.bf16.mxu0 0
    %2879 = vmatpush1.bf16.msra.mxu0 %v2589
    %2880 = vmatprep.subr.bf16.mxu0 0
    %2881 = vmatpush1.bf16.msra.mxu0 %v2590
    %2882 = vmatprep.subr.bf16.mxu0 0
    %2883 = vmatpush1.bf16.msra.mxu0 %v2591
    %2884 = vmatprep.subr.bf16.mxu0 0
    %2885 = vmatpush1.bf16.msra.mxu0 %v2592
    %2886 = vmatprep.subr.bf16.mxu0 0
    %2887 = vmatpush1.bf16.msra.mxu0 %v2593
    %2888 = vmatprep.subr.bf16.mxu0 0
    %2889 = vmatpush1.bf16.msra.mxu0 %v2594
    %2890 = vmatprep.subr.bf16.mxu0 0
    %2891 = vmatpush1.bf16.msra.mxu0 %v2595
    %2892 = vmatprep.subr.bf16.mxu0 0
    %2893 = vmatpush1.bf16.msra.mxu0 %v2596
    %2894 = vmatprep.subr.bf16.mxu0 0
    %2895 = vmatpush1.bf16.msra.mxu0 %v2597
    %2896 = vmatprep.subr.bf16.mxu0 0
    %2897 = vmatpush1.bf16.msra.mxu0 %v2598
    %2898 = vmatprep.subr.bf16.mxu0 0
    %2899 = vmatpush1.bf16.msra.mxu0 %v2599
    %2900 = vmatprep.subr.bf16.mxu0 0
    %2901 = vmatpush1.bf16.msra.mxu0 %v2600
    %2902 = vmatprep.subr.bf16.mxu0 0
    %2903 = vmatpush1.bf16.msra.mxu0 %v2601
    %2904 = vmatprep.subr.bf16.mxu0 0
    %2905 = vmatpush1.bf16.msra.mxu0 %v2602
    %2906 = vmatprep.subr.bf16.mxu0 0
    %2907 = vmatpush1.bf16.msra.mxu0 %v2603
    %2908 = vmatprep.mubr.bf16.mxu0 %v1938
    %2909 = vmatmul.mubr.bf16.gmra.mrb[0].mxu0 %v1937
    %v2910 = vpop.f32.mrb[0].mxu0
    %v2911 = vadd.f32 %v2871, %v2910
    %v2912 = vpop.f32.mrb[0].mxu0
    %v2913 = vpop.f32.mrb[0].mxu0
    %v2914 = vpop.f32.mrb[0].mxu0
    %2915 = vdwg.mxu0
    %2916 = vmatprep.subr.bf16.mxu0 0
    %2917 = vmatpush1.bf16.msra.mxu0 %v2604
    %2918 = vmatprep.subr.bf16.mxu0 0
    %2919 = vmatpush1.bf16.msra.mxu0 %v2605
    %2920 = vmatprep.subr.bf16.mxu0 0
    %2921 = vmatpush1.bf16.msra.mxu0 %v2606
    %2922 = vmatprep.subr.bf16.mxu0 0
    %2923 = vmatpush1.bf16.msra.mxu0 %v2607
    %2924 = vmatprep.subr.bf16.mxu0 0
    %2925 = vmatpush1.bf16.msra.mxu0 %v2608
    %2926 = vmatprep.subr.bf16.mxu0 0
    %2927 = vmatpush1.bf16.msra.mxu0 %v2609
    %2928 = vmatprep.subr.bf16.mxu0 0
    %2929 = vmatpush1.bf16.msra.mxu0 %v2610
    %2930 = vmatprep.subr.bf16.mxu0 0
    %2931 = vmatpush1.bf16.msra.mxu0 %v2611
    %2932 = vmatprep.subr.bf16.mxu0 0
    %2933 = vmatpush1.bf16.msra.mxu0 %v2612
    %2934 = vmatprep.subr.bf16.mxu0 0
    %2935 = vmatpush1.bf16.msra.mxu0 %v2613
    %2936 = vmatprep.subr.bf16.mxu0 0
    %2937 = vmatpush1.bf16.msra.mxu0 %v2614
    %2938 = vmatprep.subr.bf16.mxu0 0
    %2939 = vmatpush1.bf16.msra.mxu0 %v2615
    %2940 = vmatprep.subr.bf16.mxu0 0
    %2941 = vmatpush1.bf16.msra.mxu0 %v2616
    %2942 = vmatprep.subr.bf16.mxu0 0
    %2943 = vmatpush1.bf16.msra.mxu0 %v2617
    %2944 = vmatprep.subr.bf16.mxu0 0
    %2945 = vmatpush1.bf16.msra.mxu0 %v2618
    %2946 = vmatprep.subr.bf16.mxu0 0
    %2947 = vmatpush1.bf16.msra.mxu0 %v2619
    %2948 = vmatprep.mubr.bf16.mxu0 %v1940
    %2949 = vmatmul.mubr.bf16.gmra.mrb[0].mxu0 %v1939
    %v2950 = vpop.f32.mrb[0].mxu0
    %v2951 = vadd.f32 %v2911, %v2950
    %v2952 = vpop.f32.mrb[0].mxu0
    %v2953 = vpop.f32.mrb[0].mxu0
    %v2954 = vpop.f32.mrb[0].mxu0
    %2955 = vdwg.mxu0
    %2957 = vrot.lane.b32.xlu0 %v2951, 127
    %v2958 = vpop.permute.xlu0 %2957
    %v2960 = vsub.f32 %v2951, %v2958
    %v2961 = vsub.f32 0.0, %v2960
    %v2962 = vmul.f32 %v2961, 1.442695
    %v2963 = vpow.pop %v2962
    %v2964 = vadd.f32 %v2963, 1.0
    %v2965 = vrcp.pop %v2964
    %v2966 = vsub.f32 1.0, %v2965
    %v2967 = vlaneseq
    %v2968 = vand.u32 %v2967, 127
    %vm2969 = vcmp.eq.s32.totalorder %v2968, 0
    %vm2970 = vcmp.eq.s32.totalorder %v2968, 1
    %2972 = vset.pattern.permute.xlu0 0
    %2973 = vperm.xlu0 %2972, %v2966
    %v2974 = vpop.permute.xlu0 %2973
    %v2976 = vsel %vm2970, %v2974, 0.0
    %2978 = vset.pattern.permute.xlu0 0
    %2979 = vperm.xlu0 %2978, %v2965
    %v2980 = vpop.permute.xlu0 %2979
    %v2982 = vsel %vm2969, %v2980, %v2976
    %2983 = vst [vmem:[#allocation10] sm:$0xff] %v2982
    // Predicated region
    $region38: #{tpu_custom_call.1} parent=1 // pred_check
      _
    $region39: #{tpu_custom_call.1} parent=1 // pred_check_branch
      %2985 = sbr.rel (0) target = $region41
    $region40: #{tpu_custom_call.1} parent=1 // pred_region
      %s2987 = ssub.s32 128, 128
      %2988 = vsyncadd [#allocation4], %s2987
      %s2990 = sshll.u32 [#allocation10], 4
      %s2991 = int_to_ptr.vmem [resolvable:$true] %s2990
      %2993 = dma.vmem_to_hbm [thread:$0]  %s2991, 128, %s5, [#allocation4]
    $region41: #{tpu_custom_call.1} parent=1 // pred_fallthru
      _
    // Predicated region
    $region42: #{tpu_custom_call.1} parent=1 // pred_check
      _
    $region43: #{tpu_custom_call.1} parent=1 // pred_check_branch
      %2995 = sbr.rel (0) target = $region45
    $region44: #{tpu_custom_call.1} parent=1 // pred_region
      %2996 = dma.done [#allocation4], 128
    $region45: #{tpu_custom_call.1} parent=1 // pred_fallthru
      _
    %2997 = vsyncpa [#allocation3], 1
    %2998 = vsyncpa [#allocation6], 1
    %2999 = vsyncpa [#allocation9], 1
    %3000 = vsyncpa [#allocation4], 1

</llo_original>
